<compile_context>
chip_gen: v5e
topology: v5e:2x2
jax: 0.10.0
libtpu: 0.0.40
codegen_flags: <defaults>
</compile_context>

<pallas_src>
import functools

import jax
import jax.numpy as jnp
from jax import lax
from jax.experimental import pallas as pl
from jax.experimental.pallas import tpu as pltpu


# ---------------------------------------------------------------------------
# Fused kernel (one grid step == one batch element x one output row tile)
# ---------------------------------------------------------------------------
def _srcnn_fused_kernel(x_ref, w1_ref, b1_ref, w2_ref, b2_ref, w3_ref, b3_ref,
                        o_ref, g_ref, p_ref, *, wp, row_tile):
    """Fused SRCNN forward for one (batch, row-tile) grid step.

    x_ref : (1, 1, 1, win_len)  flattened (stride wp) padded-input window
    w1_ref: (64, 81)            conv1 weights, column index = kw*9 + kh
    b1_ref: (64, 1)
    w2_ref: (32, 64)            conv2 weights (cout, cin)
    b2_ref: (32, 1)
    w3_ref: (25, 32)            conv3 weights, row index = kh*5 + kw
    b3_ref: (1, 1)              conv3 bias (SMEM scalar)
    o_ref : (1, 1, 1, row_tile*wp)  flattened output row tile (lane dense)
    g_ref : (9, m1 + 8)         VMEM scratch: row-im2col (one row per kh)
    p_ref : (81, m1)            VMEM scratch: full im2col patch matrix
    """
    tr1 = row_tile + 4                    # conv1/conv2 rows this tile needs
    m1 = tr1 * wp + 8                     # flattened spatial extent (+ slack)
    out_len = row_tile * wp

    xw = x_ref[0, 0]                      # (1, win_len)

    # ---- conv1: im2col + one MXU matmul -----------------------------------
    # Stage 1: one long contiguous slice per kh (9 slices total).
    for kh in range(9):
        g_ref[kh:kh + 1, :] = xw[:, kh * wp: kh * wp + m1 + 8]
    g = g_ref[...]                                          # (9, m1 + 8)
    # Stage 2: for each kw, a dense 9-row lane-shifted block (9 stores total).
    for kw in range(9):
        p_ref[kw * 9:(kw + 1) * 9, :] = g[:, kw:kw + m1]
    patches = p_ref[...]                                    # (81, m1)

    y1 = jnp.dot(w1_ref[...], patches, preferred_element_type=jnp.float32)
    y1 = jnp.maximum(y1 + b1_ref[...], 0.0)                 # (64, m1)

    # ---- conv2: 1x1 conv == matmul ----------------------------------------
    y2 = jnp.dot(w2_ref[...], y1, preferred_element_type=jnp.float32)
    y2 = jnp.maximum(y2 + b2_ref[...], 0.0)                 # (32, m1)

    # ---- conv3: contract channels on the MXU, then 25 shifted VPU adds ----
    planes = jnp.dot(w3_ref[...], y2, preferred_element_type=jnp.float32)  # (25, m1)

    acc = jnp.zeros((1, out_len), jnp.float32)
    for kh in range(5):
        for kw in range(5):
            off = kh * wp + kw
            acc = acc + planes[kh * 5 + kw: kh * 5 + kw + 1, off:off + out_len]

    o_ref[0, 0] = acc + b3_ref[0, 0]


# ---------------------------------------------------------------------------
# Wrapper (NCHW in / NCHW out, like the PyTorch module)
# ---------------------------------------------------------------------------
def srcnn_forward(x_nchw, params, *, row_tile=8):
    w1k, b1, w2k, b2, w3k, b3 = params
    n, cin, h, w = x_nchw.shape
    assert cin == 1, "SRCNN takes a single input channel"
    assert row_tile % 8 == 0

    hpad = ((h + row_tile - 1) // row_tile) * row_tile      # tile-aligned height
    n_rt = hpad // row_tile
    hp, wp = hpad + 12, w + 12                              # padded input extent
    tr1 = row_tile + 4
    m1 = tr1 * wp + 8
    win_len = (row_tile + 12) * wp + 16                     # 12-row halo + slack
    out_len = row_tile * wp

    # --- host-side layout glue (single-channel input + tiny weights) -------
    xp = jnp.pad(x_nchw[:, 0].astype(jnp.float32),
                 ((0, 0), (6, 6 + hpad - h), (6, 6)))        # (n, hp, wp)
    xp_flat = jnp.pad(xp.reshape(n, hp * wp), ((0, 0), (0, 16)))
    windows = jnp.stack(
        [xp_flat[:, r * row_tile * wp: r * row_tile * wp + win_len]
         for r in range(n_rt)], axis=1)[:, :, None, :]       # (n, n_rt, 1, win_len)

    # Weights in channel-major matmul layout.
    w1t = jnp.transpose(w1k, (1, 0, 2)).reshape(81, 64).T    # (64, 81), col = kw*9+kh
    w2t = w2k.T                                              # (32, 64)
    w3m = w3k.reshape(25, 32)                                # (25, 32), row = kh*5+kw
    b1c = b1.reshape(64, 1)
    b2c = b2.reshape(32, 1)
    b3s = b3.reshape(1, 1)

    kernel = functools.partial(_srcnn_fused_kernel, wp=wp, row_tile=row_tile)

    out = pl.pallas_call(
        kernel,
        out_shape=jax.ShapeDtypeStruct((n, n_rt, 1, out_len), jnp.float32),
        grid=(n, n_rt),
        in_specs=[
            pl.BlockSpec((1, 1, 1, win_len), lambda b, r: (b, r, 0, 0)),
            pl.BlockSpec((64, 81), lambda b, r: (0, 0)),
            pl.BlockSpec((64, 1), lambda b, r: (0, 0)),
            pl.BlockSpec((32, 64), lambda b, r: (0, 0)),
            pl.BlockSpec((32, 1), lambda b, r: (0, 0)),
            pl.BlockSpec((25, 32), lambda b, r: (0, 0)),
            pl.BlockSpec(memory_space=pltpu.MemorySpace.SMEM),   # conv3 bias
        ],
        out_specs=pl.BlockSpec((1, 1, 1, out_len), lambda b, r: (b, r, 0, 0)),
        scratch_shapes=[
            pltpu.VMEM((9, m1 + 8), jnp.float32),    # row-im2col stage
            pltpu.VMEM((81, m1), jnp.float32),       # full im2col patches
        ],
        compiler_params=pltpu.CompilerParams(
            dimension_semantics=("parallel", "parallel"),
            vmem_limit_bytes=48 * 1024 * 1024),
    )(windows, w1t, b1c, w2t, b2c, w3m, b3s)

    # Drop stride-padding junk columns / tile-padding junk rows; back to NCHW.
    out = out.reshape(n, hpad, wp)[:, :h, :w]
    return out[:, None, :, :]


# ---------------------------------------------------------------------------
# Pure-JAX reference (mirrors the PyTorch forward exactly)
# ---------------------------------------------------------------------------
def srcnn_ref(x_nchw, params):
    w1k, b1, w2k, b2, w3k, b3 = params
    dn = ("NCHW", "OIHW", "NCHW")
    r1 = jnp.transpose(w1k, (2, 0, 1))[:, None, :, :]        # (64, 1, 9, 9)
    r2 = w2k.T[:, :, None, None]                             # (32, 64, 1, 1)
    r3 = jnp.transpose(w3k, (2, 0, 1))[None, :, :, :]        # (1, 32, 5, 5)
    o = lax.conv_general_dilated(x_nchw, r1, (1, 1), [(6, 6), (6, 6)],
                                 dimension_numbers=dn)
    o = jax.nn.relu(o + b1[None, :, None, None])
    o = lax.conv_general_dilated(o, r2, (1, 1), "VALID", dimension_numbers=dn)
    o = jax.nn.relu(o + b2[None, :, None, None])
    o = lax.conv_general_dilated(o, r3, (1, 1), "VALID", dimension_numbers=dn)
    return o + b3[None, :, None, None]


# ---------------------------------------------------------------------------
def make_params(key):
    k1, k2, k3, k4, k5, k6 = jax.random.split(key, 6)
    w1k = 0.1 * jax.random.normal(k1, (9, 9, 64), jnp.float32)   # conv1 (kh,kw,cout), cin=1
    b1 = 0.01 * jax.random.normal(k2, (64,), jnp.float32)
    w2k = 0.1 * jax.random.normal(k3, (64, 32), jnp.float32)     # conv2 (cin,cout)
    b2 = 0.01 * jax.random.normal(k4, (32,), jnp.float32)
    w3k = 0.1 * jax.random.normal(k5, (5, 5, 32), jnp.float32)   # conv3 (kh,kw,cin), cout=1
    b3 = 0.01 * jax.random.normal(k6, (1,), jnp.float32)
    return (w1k, b1, w2k, b2, w3k, b3)


if __name__ == "__main__":
    key = jax.random.PRNGKey(0)
    kx, kp = jax.random.split(key)
    x = jax.random.normal(kx, (2, 1, 16, 16), jnp.float32)   # NCHW, like PyTorch
    params = make_params(kp)

    out = jax.block_until_ready(srcnn_forward(x, params))
    assert out.shape == (2, 1, 16, 16), out.shape

    ref = jax.block_until_ready(srcnn_ref(x, params))
    assert jnp.allclose(out, ref, atol=2e-3, rtol=2e-3), (
        float(jnp.max(jnp.abs(out - ref))))

    print("KERNEL_OK")
</pallas_src>

<mosaic_0001>
module attributes {stable_mosaic.version = 11 : i64} {
  func.func @_srcnn_fused_kernel(%arg0: i32, %arg1: i32, %arg2: memref<1x1x1x576xf32, #tpu.memory_space<vmem>>, %arg3: memref<64x81xf32, #tpu.memory_space<vmem>>, %arg4: memref<64x1xf32, #tpu.memory_space<vmem>>, %arg5: memref<32x64xf32, #tpu.memory_space<vmem>>, %arg6: memref<32x1xf32, #tpu.memory_space<vmem>>, %arg7: memref<25x32xf32, #tpu.memory_space<vmem>>, %arg8: memref<1x1xf32, #tpu.memory_space<smem>>, %arg9: memref<1x1x1x224xf32, #tpu.memory_space<vmem>>, %arg10: memref<9x352xf32, #tpu.memory_space<vmem>>, %arg11: memref<81x344xf32, #tpu.memory_space<vmem>>) attributes {dimension_semantics = [#tpu.dimension_semantics<parallel>, #tpu.dimension_semantics<parallel>], iteration_bounds = array<i64: 2, 2>, scalar_prefetch = 0 : i64, scratch_operands = 2 : i64, tpu.core_type = #tpu.core_type<tc>, window_params = [{transform_indices = @transform_0, window_bounds = array<i64: 1, 1, 1, 576>}, {pipeline_mode = #tpu.pipeline_mode<synchronous>, transform_indices = @transform_1, window_bounds = array<i64: 64, 81>}, {pipeline_mode = #tpu.pipeline_mode<synchronous>, transform_indices = @transform_2, window_bounds = array<i64: 64, 1>}, {pipeline_mode = #tpu.pipeline_mode<synchronous>, transform_indices = @transform_3, window_bounds = array<i64: 32, 64>}, {pipeline_mode = #tpu.pipeline_mode<synchronous>, transform_indices = @transform_4, window_bounds = array<i64: 32, 1>}, {pipeline_mode = #tpu.pipeline_mode<synchronous>, transform_indices = @transform_5, window_bounds = array<i64: 25, 32>}, {transform_indices = @transform_6, window_bounds = array<i64: 1, 1>}, {transform_indices = @transform_7, window_bounds = array<i64: 1, 1, 1, 224>}]} {
    %c0 = arith.constant 0 : index
    %c0_0 = arith.constant 0 : index
    %c0_1 = arith.constant 0 : index
    %c0_2 = arith.constant 0 : index
    %0 = vector.load %arg2[%c0, %c0_0, %c0_1, %c0_2] : memref<1x1x1x576xf32, #tpu.memory_space<vmem>>, vector<1x1x1x576xf32>
    %1 = vector.shape_cast %0 : vector<1x1x1x576xf32> to vector<1x576xf32>
    %2 = vector.extract_strided_slice %1 {offsets = [0, 0], sizes = [1, 352], strides = [1, 1]} : vector<1x576xf32> to vector<1x352xf32>
    %c0_3 = arith.constant 0 : index
    %c0_4 = arith.constant 0 : index
    %3 = vector.load %arg10[%c0_3, %c0_4] : memref<9x352xf32, #tpu.memory_space<vmem>>, vector<1x352xf32>
    tpu.vector_store %arg10[%c0_3, %c0_4], %2 {strides = array<i32>} : memref<9x352xf32, #tpu.memory_space<vmem>>, vector<1x352xf32>,
    %4 = vector.extract_strided_slice %1 {offsets = [0, 28], sizes = [1, 352], strides = [1, 1]} : vector<1x576xf32> to vector<1x352xf32>
    %c1 = arith.constant 1 : index
    %c0_5 = arith.constant 0 : index
    %5 = vector.load %arg10[%c1, %c0_5] : memref<9x352xf32, #tpu.memory_space<vmem>>, vector<1x352xf32>
    tpu.vector_store %arg10[%c1, %c0_5], %4 {strides = array<i32>} : memref<9x352xf32, #tpu.memory_space<vmem>>, vector<1x352xf32>,
    %6 = vector.extract_strided_slice %1 {offsets = [0, 56], sizes = [1, 352], strides = [1, 1]} : vector<1x576xf32> to vector<1x352xf32>
    %c2 = arith.constant 2 : index
    %c0_6 = arith.constant 0 : index
    %7 = vector.load %arg10[%c2, %c0_6] : memref<9x352xf32, #tpu.memory_space<vmem>>, vector<1x352xf32>
    tpu.vector_store %arg10[%c2, %c0_6], %6 {strides = array<i32>} : memref<9x352xf32, #tpu.memory_space<vmem>>, vector<1x352xf32>,
    %8 = vector.extract_strided_slice %1 {offsets = [0, 84], sizes = [1, 352], strides = [1, 1]} : vector<1x576xf32> to vector<1x352xf32>
    %c3 = arith.constant 3 : index
    %c0_7 = arith.constant 0 : index
    %9 = vector.load %arg10[%c3, %c0_7] : memref<9x352xf32, #tpu.memory_space<vmem>>, vector<1x352xf32>
    tpu.vector_store %arg10[%c3, %c0_7], %8 {strides = array<i32>} : memref<9x352xf32, #tpu.memory_space<vmem>>, vector<1x352xf32>,
    %10 = vector.extract_strided_slice %1 {offsets = [0, 112], sizes = [1, 352], strides = [1, 1]} : vector<1x576xf32> to vector<1x352xf32>
    %c4 = arith.constant 4 : index
    %c0_8 = arith.constant 0 : index
    %11 = vector.load %arg10[%c4, %c0_8] : memref<9x352xf32, #tpu.memory_space<vmem>>, vector<1x352xf32>
    tpu.vector_store %arg10[%c4, %c0_8], %10 {strides = array<i32>} : memref<9x352xf32, #tpu.memory_space<vmem>>, vector<1x352xf32>,
    %12 = vector.extract_strided_slice %1 {offsets = [0, 140], sizes = [1, 352], strides = [1, 1]} : vector<1x576xf32> to vector<1x352xf32>
    %c5 = arith.constant 5 : index
    %c0_9 = arith.constant 0 : index
    %13 = vector.load %arg10[%c5, %c0_9] : memref<9x352xf32, #tpu.memory_space<vmem>>, vector<1x352xf32>
    tpu.vector_store %arg10[%c5, %c0_9], %12 {strides = array<i32>} : memref<9x352xf32, #tpu.memory_space<vmem>>, vector<1x352xf32>,
    %14 = vector.extract_strided_slice %1 {offsets = [0, 168], sizes = [1, 352], strides = [1, 1]} : vector<1x576xf32> to vector<1x352xf32>
    %c6 = arith.constant 6 : index
    %c0_10 = arith.constant 0 : index
    %15 = vector.load %arg10[%c6, %c0_10] : memref<9x352xf32, #tpu.memory_space<vmem>>, vector<1x352xf32>
    tpu.vector_store %arg10[%c6, %c0_10], %14 {strides = array<i32>} : memref<9x352xf32, #tpu.memory_space<vmem>>, vector<1x352xf32>,
    %16 = vector.extract_strided_slice %1 {offsets = [0, 196], sizes = [1, 352], strides = [1, 1]} : vector<1x576xf32> to vector<1x352xf32>
    %c7 = arith.constant 7 : index
    %c0_11 = arith.constant 0 : index
    %17 = vector.load %arg10[%c7, %c0_11] : memref<9x352xf32, #tpu.memory_space<vmem>>, vector<1x352xf32>
    tpu.vector_store %arg10[%c7, %c0_11], %16 {strides = array<i32>} : memref<9x352xf32, #tpu.memory_space<vmem>>, vector<1x352xf32>,
    %18 = vector.extract_strided_slice %1 {offsets = [0, 224], sizes = [1, 352], strides = [1, 1]} : vector<1x576xf32> to vector<1x352xf32>
    %c8 = arith.constant 8 : index
    %c0_12 = arith.constant 0 : index
    %19 = vector.load %arg10[%c8, %c0_12] : memref<9x352xf32, #tpu.memory_space<vmem>>, vector<1x352xf32>
    tpu.vector_store %arg10[%c8, %c0_12], %18 {strides = array<i32>} : memref<9x352xf32, #tpu.memory_space<vmem>>, vector<1x352xf32>,
    %c0_13 = arith.constant 0 : index
    %c0_14 = arith.constant 0 : index
    %20 = vector.load %arg10[%c0_13, %c0_14] : memref<9x352xf32, #tpu.memory_space<vmem>>, vector<9x352xf32>
    %21 = vector.extract_strided_slice %20 {offsets = [0, 0], sizes = [9, 344], strides = [1, 1]} : vector<9x352xf32> to vector<9x344xf32>
    %c0_15 = arith.constant 0 : index
    %c0_16 = arith.constant 0 : index
    %22 = vector.load %arg11[%c0_15, %c0_16] : memref<81x344xf32, #tpu.memory_space<vmem>>, vector<9x344xf32>
    tpu.vector_store %arg11[%c0_15, %c0_16], %21 {strides = array<i32>} : memref<81x344xf32, #tpu.memory_space<vmem>>, vector<9x344xf32>,
    %23 = vector.extract_strided_slice %20 {offsets = [0, 1], sizes = [9, 344], strides = [1, 1]} : vector<9x352xf32> to vector<9x344xf32>
    %c9 = arith.constant 9 : index
    %c0_17 = arith.constant 0 : index
    %24 = vector.load %arg11[%c9, %c0_17] : memref<81x344xf32, #tpu.memory_space<vmem>>, vector<9x344xf32>
    tpu.vector_store %arg11[%c9, %c0_17], %23 {strides = array<i32>} : memref<81x344xf32, #tpu.memory_space<vmem>>, vector<9x344xf32>,
    %25 = vector.extract_strided_slice %20 {offsets = [0, 2], sizes = [9, 344], strides = [1, 1]} : vector<9x352xf32> to vector<9x344xf32>
    %c18 = arith.constant 18 : index
    %c0_18 = arith.constant 0 : index
    %26 = vector.load %arg11[%c18, %c0_18] : memref<81x344xf32, #tpu.memory_space<vmem>>, vector<9x344xf32>
    tpu.vector_store %arg11[%c18, %c0_18], %25 {strides = array<i32>} : memref<81x344xf32, #tpu.memory_space<vmem>>, vector<9x344xf32>,
    %27 = vector.extract_strided_slice %20 {offsets = [0, 3], sizes = [9, 344], strides = [1, 1]} : vector<9x352xf32> to vector<9x344xf32>
    %c27 = arith.constant 27 : index
    %c0_19 = arith.constant 0 : index
    %28 = vector.load %arg11[%c27, %c0_19] : memref<81x344xf32, #tpu.memory_space<vmem>>, vector<9x344xf32>
    tpu.vector_store %arg11[%c27, %c0_19], %27 {strides = array<i32>} : memref<81x344xf32, #tpu.memory_space<vmem>>, vector<9x344xf32>,
    %29 = vector.extract_strided_slice %20 {offsets = [0, 4], sizes = [9, 344], strides = [1, 1]} : vector<9x352xf32> to vector<9x344xf32>
    %c36 = arith.constant 36 : index
    %c0_20 = arith.constant 0 : index
    %30 = vector.load %arg11[%c36, %c0_20] : memref<81x344xf32, #tpu.memory_space<vmem>>, vector<9x344xf32>
    tpu.vector_store %arg11[%c36, %c0_20], %29 {strides = array<i32>} : memref<81x344xf32, #tpu.memory_space<vmem>>, vector<9x344xf32>,
    %31 = vector.extract_strided_slice %20 {offsets = [0, 5], sizes = [9, 344], strides = [1, 1]} : vector<9x352xf32> to vector<9x344xf32>
    %c45 = arith.constant 45 : index
    %c0_21 = arith.constant 0 : index
    %32 = vector.load %arg11[%c45, %c0_21] : memref<81x344xf32, #tpu.memory_space<vmem>>, vector<9x344xf32>
    tpu.vector_store %arg11[%c45, %c0_21], %31 {strides = array<i32>} : memref<81x344xf32, #tpu.memory_space<vmem>>, vector<9x344xf32>,
    %33 = vector.extract_strided_slice %20 {offsets = [0, 6], sizes = [9, 344], strides = [1, 1]} : vector<9x352xf32> to vector<9x344xf32>
    %c54 = arith.constant 54 : index
    %c0_22 = arith.constant 0 : index
    %34 = vector.load %arg11[%c54, %c0_22] : memref<81x344xf32, #tpu.memory_space<vmem>>, vector<9x344xf32>
    tpu.vector_store %arg11[%c54, %c0_22], %33 {strides = array<i32>} : memref<81x344xf32, #tpu.memory_space<vmem>>, vector<9x344xf32>,
    %35 = vector.extract_strided_slice %20 {offsets = [0, 7], sizes = [9, 344], strides = [1, 1]} : vector<9x352xf32> to vector<9x344xf32>
    %c63 = arith.constant 63 : index
    %c0_23 = arith.constant 0 : index
    %36 = vector.load %arg11[%c63, %c0_23] : memref<81x344xf32, #tpu.memory_space<vmem>>, vector<9x344xf32>
    tpu.vector_store %arg11[%c63, %c0_23], %35 {strides = array<i32>} : memref<81x344xf32, #tpu.memory_space<vmem>>, vector<9x344xf32>,
    %37 = vector.extract_strided_slice %20 {offsets = [0, 8], sizes = [9, 344], strides = [1, 1]} : vector<9x352xf32> to vector<9x344xf32>
    %c72 = arith.constant 72 : index
    %c0_24 = arith.constant 0 : index
    %38 = vector.load %arg11[%c72, %c0_24] : memref<81x344xf32, #tpu.memory_space<vmem>>, vector<9x344xf32>
    tpu.vector_store %arg11[%c72, %c0_24], %37 {strides = array<i32>} : memref<81x344xf32, #tpu.memory_space<vmem>>, vector<9x344xf32>,
    %c0_25 = arith.constant 0 : index
    %c0_26 = arith.constant 0 : index
    %39 = vector.load %arg11[%c0_25, %c0_26] : memref<81x344xf32, #tpu.memory_space<vmem>>, vector<81x344xf32>
    %c0_27 = arith.constant 0 : index
    %c0_28 = arith.constant 0 : index
    %40 = vector.load %arg3[%c0_27, %c0_28] : memref<64x81xf32, #tpu.memory_space<vmem>>, vector<64x81xf32>
    %cst = arith.constant dense<0.000000e+00> : vector<64x344xf32>
    %41 = tpu.matmul %40, %39, %cst {dimension_numbers = #tpu.dot_dimension_numbers<[1], [0], [0], [1], [0, 0, 1, 1], [], []>} : vector<64x81xf32>, vector<81x344xf32>, vector<64x344xf32> -> vector<64x344xf32>
    %c0_29 = arith.constant 0 : index
    %c0_30 = arith.constant 0 : index
    %42 = vector.load %arg4[%c0_29, %c0_30] : memref<64x1xf32, #tpu.memory_space<vmem>>, vector<64x1xf32>
    %43 = vector.broadcast %42 : vector<64x1xf32> to vector<64x344xf32>
    %44 = arith.addf %41, %43 : vector<64x344xf32>
    %cst_31 = arith.constant 0.000000e+00 : f32
    %45 = vector.broadcast %cst_31 : f32 to vector<64x344xf32>
    %46 = arith.maximumf %44, %45 : vector<64x344xf32>
    %c0_32 = arith.constant 0 : index
    %c0_33 = arith.constant 0 : index
    %47 = vector.load %arg5[%c0_32, %c0_33] : memref<32x64xf32, #tpu.memory_space<vmem>>, vector<32x64xf32>
    %cst_34 = arith.constant dense<0.000000e+00> : vector<32x344xf32>
    %48 = tpu.matmul %47, %46, %cst_34 {dimension_numbers = #tpu.dot_dimension_numbers<[1], [0], [0], [1], [0, 0, 1, 1], [], []>} : vector<32x64xf32>, vector<64x344xf32>, vector<32x344xf32> -> vector<32x344xf32>
    %c0_35 = arith.constant 0 : index
    %c0_36 = arith.constant 0 : index
    %49 = vector.load %arg6[%c0_35, %c0_36] : memref<32x1xf32, #tpu.memory_space<vmem>>, vector<32x1xf32>
    %50 = vector.broadcast %49 : vector<32x1xf32> to vector<32x344xf32>
    %51 = arith.addf %48, %50 : vector<32x344xf32>
    %cst_37 = arith.constant 0.000000e+00 : f32
    %52 = vector.broadcast %cst_37 : f32 to vector<32x344xf32>
    %53 = arith.maximumf %51, %52 : vector<32x344xf32>
    %c0_38 = arith.constant 0 : index
    %c0_39 = arith.constant 0 : index
    %54 = vector.load %arg7[%c0_38, %c0_39] : memref<25x32xf32, #tpu.memory_space<vmem>>, vector<25x32xf32>
    %cst_40 = arith.constant dense<0.000000e+00> : vector<25x344xf32>
    %55 = tpu.matmul %54, %53, %cst_40 {dimension_numbers = #tpu.dot_dimension_numbers<[1], [0], [0], [1], [0, 0, 1, 1], [], []>} : vector<25x32xf32>, vector<32x344xf32>, vector<25x344xf32> -> vector<25x344xf32>
    %cst_41 = arith.constant 0.000000e+00 : f32
    %56 = vector.broadcast %cst_41 : f32 to vector<1x224xf32>
    %57 = vector.extract_strided_slice %55 {offsets = [0, 0], sizes = [1, 224], strides = [1, 1]} : vector<25x344xf32> to vector<1x224xf32>
    %58 = arith.addf %56, %57 : vector<1x224xf32>
    %59 = vector.extract_strided_slice %55 {offsets = [1, 1], sizes = [1, 224], strides = [1, 1]} : vector<25x344xf32> to vector<1x224xf32>
    %60 = arith.addf %58, %59 : vector<1x224xf32>
    %61 = vector.extract_strided_slice %55 {offsets = [2, 2], sizes = [1, 224], strides = [1, 1]} : vector<25x344xf32> to vector<1x224xf32>
    %62 = arith.addf %60, %61 : vector<1x224xf32>
    %63 = vector.extract_strided_slice %55 {offsets = [3, 3], sizes = [1, 224], strides = [1, 1]} : vector<25x344xf32> to vector<1x224xf32>
    %64 = arith.addf %62, %63 : vector<1x224xf32>
    %65 = vector.extract_strided_slice %55 {offsets = [4, 4], sizes = [1, 224], strides = [1, 1]} : vector<25x344xf32> to vector<1x224xf32>
    %66 = arith.addf %64, %65 : vector<1x224xf32>
    %67 = vector.extract_strided_slice %55 {offsets = [5, 28], sizes = [1, 224], strides = [1, 1]} : vector<25x344xf32> to vector<1x224xf32>
    %68 = arith.addf %66, %67 : vector<1x224xf32>
    %69 = vector.extract_strided_slice %55 {offsets = [6, 29], sizes = [1, 224], strides = [1, 1]} : vector<25x344xf32> to vector<1x224xf32>
    %70 = arith.addf %68, %69 : vector<1x224xf32>
    %71 = vector.extract_strided_slice %55 {offsets = [7, 30], sizes = [1, 224], strides = [1, 1]} : vector<25x344xf32> to vector<1x224xf32>
    %72 = arith.addf %70, %71 : vector<1x224xf32>
    %73 = vector.extract_strided_slice %55 {offsets = [8, 31], sizes = [1, 224], strides = [1, 1]} : vector<25x344xf32> to vector<1x224xf32>
    %74 = arith.addf %72, %73 : vector<1x224xf32>
    %75 = vector.extract_strided_slice %55 {offsets = [9, 32], sizes = [1, 224], strides = [1, 1]} : vector<25x344xf32> to vector<1x224xf32>
    %76 = arith.addf %74, %75 : vector<1x224xf32>
    %77 = vector.extract_strided_slice %55 {offsets = [10, 56], sizes = [1, 224], strides = [1, 1]} : vector<25x344xf32> to vector<1x224xf32>
    %78 = arith.addf %76, %77 : vector<1x224xf32>
    %79 = vector.extract_strided_slice %55 {offsets = [11, 57], sizes = [1, 224], strides = [1, 1]} : vector<25x344xf32> to vector<1x224xf32>
    %80 = arith.addf %78, %79 : vector<1x224xf32>
    %81 = vector.extract_strided_slice %55 {offsets = [12, 58], sizes = [1, 224], strides = [1, 1]} : vector<25x344xf32> to vector<1x224xf32>
    %82 = arith.addf %80, %81 : vector<1x224xf32>
    %83 = vector.extract_strided_slice %55 {offsets = [13, 59], sizes = [1, 224], strides = [1, 1]} : vector<25x344xf32> to vector<1x224xf32>
    %84 = arith.addf %82, %83 : vector<1x224xf32>
    %85 = vector.extract_strided_slice %55 {offsets = [14, 60], sizes = [1, 224], strides = [1, 1]} : vector<25x344xf32> to vector<1x224xf32>
    %86 = arith.addf %84, %85 : vector<1x224xf32>
    %87 = vector.extract_strided_slice %55 {offsets = [15, 84], sizes = [1, 224], strides = [1, 1]} : vector<25x344xf32> to vector<1x224xf32>
    %88 = arith.addf %86, %87 : vector<1x224xf32>
    %89 = vector.extract_strided_slice %55 {offsets = [16, 85], sizes = [1, 224], strides = [1, 1]} : vector<25x344xf32> to vector<1x224xf32>
    %90 = arith.addf %88, %89 : vector<1x224xf32>
    %91 = vector.extract_strided_slice %55 {offsets = [17, 86], sizes = [1, 224], strides = [1, 1]} : vector<25x344xf32> to vector<1x224xf32>
    %92 = arith.addf %90, %91 : vector<1x224xf32>
    %93 = vector.extract_strided_slice %55 {offsets = [18, 87], sizes = [1, 224], strides = [1, 1]} : vector<25x344xf32> to vector<1x224xf32>
    %94 = arith.addf %92, %93 : vector<1x224xf32>
    %95 = vector.extract_strided_slice %55 {offsets = [19, 88], sizes = [1, 224], strides = [1, 1]} : vector<25x344xf32> to vector<1x224xf32>
    %96 = arith.addf %94, %95 : vector<1x224xf32>
    %97 = vector.extract_strided_slice %55 {offsets = [20, 112], sizes = [1, 224], strides = [1, 1]} : vector<25x344xf32> to vector<1x224xf32>
    %98 = arith.addf %96, %97 : vector<1x224xf32>
    %99 = vector.extract_strided_slice %55 {offsets = [21, 113], sizes = [1, 224], strides = [1, 1]} : vector<25x344xf32> to vector<1x224xf32>
    %100 = arith.addf %98, %99 : vector<1x224xf32>
    %101 = vector.extract_strided_slice %55 {offsets = [22, 114], sizes = [1, 224], strides = [1, 1]} : vector<25x344xf32> to vector<1x224xf32>
    %102 = arith.addf %100, %101 : vector<1x224xf32>
    %103 = vector.extract_strided_slice %55 {offsets = [23, 115], sizes = [1, 224], strides = [1, 1]} : vector<25x344xf32> to vector<1x224xf32>
    %104 = arith.addf %102, %103 : vector<1x224xf32>
    %105 = vector.extract_strided_slice %55 {offsets = [24, 116], sizes = [1, 224], strides = [1, 1]} : vector<25x344xf32> to vector<1x224xf32>
    %106 = arith.addf %104, %105 : vector<1x224xf32>
    %c0_42 = arith.constant 0 : index
    %c0_43 = arith.constant 0 : index
    %107 = memref.load %arg8[%c0_42, %c0_43] : memref<1x1xf32, #tpu.memory_space<smem>>
    %108 = vector.broadcast %107 : f32 to vector<1x224xf32>
    %109 = arith.addf %106, %108 : vector<1x224xf32>
    %c0_44 = arith.constant 0 : index
    %c0_45 = arith.constant 0 : index
    %c0_46 = arith.constant 0 : index
    %c0_47 = arith.constant 0 : index
    %110 = vector.load %arg9[%c0_44, %c0_45, %c0_46, %c0_47] : memref<1x1x1x224xf32, #tpu.memory_space<vmem>>, vector<1x1x1x224xf32>
    %111 = vector.shape_cast %110 : vector<1x1x1x224xf32> to vector<1x224xf32>
    %112 = vector.shape_cast %109 : vector<1x224xf32> to vector<1x1x1x224xf32>
    tpu.vector_store %arg9[%c0_44, %c0_45, %c0_46, %c0_47], %112 {strides = array<i32>} : memref<1x1x1x224xf32, #tpu.memory_space<vmem>>, vector<1x1x1x224xf32>,
    return
  }
  func.func @transform_0(%arg0: i32, %arg1: i32) -> (i32, i32, i32, i32) {
    %c0_i32 = arith.constant 0 : i32
    %c0_i32_0 = arith.constant 0 : i32
    %c0_i32_1 = arith.constant 0 : i32
    return %arg0, %arg1, %c0_i32, %c0_i32_0 : i32, i32, i32, i32
  }
  func.func @transform_1(%arg0: i32, %arg1: i32) -> (i32, i32) {
    %c0_i32 = arith.constant 0 : i32
    %c0_i32_0 = arith.constant 0 : i32
    %c0_i32_1 = arith.constant 0 : i32
    return %c0_i32, %c0_i32_0 : i32, i32
  }
  func.func @transform_2(%arg0: i32, %arg1: i32) -> (i32, i32) {
    %c0_i32 = arith.constant 0 : i32
    %c0_i32_0 = arith.constant 0 : i32
    %c0_i32_1 = arith.constant 0 : i32
    return %c0_i32, %c0_i32_0 : i32, i32
  }
  func.func @transform_3(%arg0: i32, %arg1: i32) -> (i32, i32) {
    %c0_i32 = arith.constant 0 : i32
    %c0_i32_0 = arith.constant 0 : i32
    %c0_i32_1 = arith.constant 0 : i32
    return %c0_i32, %c0_i32_0 : i32, i32
  }
  func.func @transform_4(%arg0: i32, %arg1: i32) -> (i32, i32) {
    %c0_i32 = arith.constant 0 : i32
    %c0_i32_0 = arith.constant 0 : i32
    %c0_i32_1 = arith.constant 0 : i32
    return %c0_i32, %c0_i32_0 : i32, i32
  }
  func.func @transform_5(%arg0: i32, %arg1: i32) -> (i32, i32) {
    %c0_i32 = arith.constant 0 : i32
    %c0_i32_0 = arith.constant 0 : i32
    %c0_i32_1 = arith.constant 0 : i32
    return %c0_i32, %c0_i32_0 : i32, i32
  }
  func.func @transform_6(%arg0: i32, %arg1: i32) -> (i32, i32) {
    %c0_i32 = arith.constant 0 : i32
    %c0_i32_0 = arith.constant 0 : i32
    %c0_i32_1 = arith.constant 0 : i32
    return %c0_i32, %c0_i32_0 : i32, i32
  }
  func.func @transform_7(%arg0: i32, %arg1: i32) -> (i32, i32, i32, i32) {
    %c0_i32 = arith.constant 0 : i32
    %c0_i32_0 = arith.constant 0 : i32
    %c0_i32_1 = arith.constant 0 : i32
    return %arg0, %arg1, %c0_i32, %c0_i32_0 : i32, i32, i32, i32
  }
}

</mosaic_0001>

<llo_original>
// kernel: tpu_custom_call.1
$region0: #{tpu_custom_call.1}
  #allocation0 [shape = 'u32[]', space=smem, size = 0x4, offset = 0x4, fixed_abs, tag = 'smem constant byte address 0x4 - core index']
  #allocation1 [shape = 'u32[72,128]{1,0:T(1,128)}', space=vmem, size = 0x9000, scoped, tag = 'internal scratch']
  #allocation2 [shape = 'f32[9,352]{1,0:T(8,128)}', space=vmem, size = 0x6000, scoped, tag = 'scratch operand']
  #allocation3 [shape = 'f32[81,344]{1,0:T(8,128)}', space=vmem, size = 0x21000, scoped, tag = 'scratch operand']
  #allocation4 [shape = 'f32[1,1]{1,0:T(1,128)S(6)}', space=smem, size = 0x200, scoped, tag = 'scoped memory for tpu_custom_call.1']
  %s0 = inlined_call_operand.hbm [shape: f32[2,2,1,576], index: 0, kind: input, shape index: {}]
  %s1 = inlined_call_operand.vmem [shape: f32[64,81], index: 1, kind: input, shape index: {}]
  %s2 = inlined_call_operand.vmem [shape: f32[64,1], index: 2, kind: input, shape index: {}]
  %s3 = inlined_call_operand.vmem [shape: f32[32,64], index: 3, kind: input, shape index: {}]
  %s4 = inlined_call_operand.vmem [shape: f32[32,1], index: 4, kind: input, shape index: {}]
  %s5 = inlined_call_operand.hbm [shape: f32[25,32], index: 5, kind: input, shape index: {}]
  %s6 = inlined_call_operand.<no memory space> [shape: f32[1,1], index: 6, kind: input, shape index: {}]
  %s7 = inlined_call_operand.hbm [shape: f32[2,2,1,224], index: 7, kind: output, shape index: {}]
  %s8 = sld [smem:[#allocation0]]
  $region69: #{tpu_custom_call.1} parent=0
    _
  %s10 = ssub.s32 1, %s8
  %s11 = scalar_select 0, %s10, %s8
  %12 = sst [smem:[#allocation4]] %s6
  $region1: #{tpu_custom_call.1} parent=0
    #allocation5 [shape = 'u8[5120]{0}', space=vmem, size = 0x1400, scoped, tag = 'input window, operand 0']
    #allocation6 [shape = 's32[2]{0}', space=sflag, size = 0x8, scoped, tag = 'scoped memory for tpu_custom_call.1']
    #allocation7 [shape = 's32[2]{0}', space=sflag, size = 0x8, scoped, tag = 'scoped memory for tpu_custom_call.1']
    #allocation8 [shape = 'u8[16384]{0}', space=vmem, size = 0x4000, scoped, tag = 'input window, operand 5, single buffered']
    #allocation9 [shape = 's32[1]{0}', space=sflag, size = 0x4, scoped, tag = 'scoped memory for tpu_custom_call.1']
    #allocation10 [shape = 'u8[2048]{0}', space=vmem, size = 0x800, scoped, tag = 'output window, operand 0']
    %13 = vsyncpa [#allocation6], 0
    %s14 = scalar_lea.sflag [#allocation6], 1
    %15 = vsyncpa %s14, 0
    %16 = vsyncpa [#allocation9], 0
    %17 = vsyncpa [#allocation7], 0
    %s18 = scalar_lea.sflag [#allocation7], 1
    %19 = vsyncpa %s18, 0
    loop: start=0, step=1, limit=6
    $region2: #{tpu_custom_call.1} parent=1 // loop_pre_header
      _
    $region3: #{tpu_custom_call.1} parent=1 // loop_header
      %s21 = sphi 0, %s25
      %p22 = scmp.ge.s32.totalorder %s21, 6
      %s28 = sphi 0, %s40
      %s29 = sphi 0, %s36
      %s30 = sphi 0, %s28
      %s31 = sphi 0, %s29
      %s32 = sphi 0, %s30
      %s33 = sphi 0, %s31
      %s45 = sphi 0, %s47
      %s48 = sphi 0, %s45
      %s49 = sphi 0, %s48
      %s65 = sphi 0, %s49
      %s69 = sphi 0, %s69
      %s71 = sphi 0, %s69
      %s72 = sphi 0, %s71
      %s86 = sphi 0, %s72
      %s90 = sphi 0, %s90
      %s92 = sphi 0, %s90
      %s93 = sphi 0, %s92
      %s107 = sphi 0, %s93
      %s111 = sphi 0, %s111
      %s113 = sphi 0, %s111
      %s114 = sphi 0, %s113
      %s128 = sphi 0, %s114
      %s132 = sphi 0, %s132
      %s134 = sphi 0, %s132
      %s135 = sphi 0, %s134
      %s149 = sphi 0, %s135
      %s153 = sphi 0, %s153
      %s155 = sphi 0, %s153
      %s156 = sphi 0, %s155
      %s170 = sphi 0, %s156
      %s174 = sphi 0, %s174
      %s176 = sphi 0, %s174
      %s177 = sphi 0, %s176
      %s191 = sphi 0, %s177
      %s199 = sphi 0, %s201
      %s202 = sphi 0, %s199
      %s203 = sphi 0, %s202
      %s219 = sphi 0, %s203
    $region4: #{tpu_custom_call.1} parent=1 // loop_header_branch
      %24 = sbr.rel (%p22) target = $region8
    $region5: #{tpu_custom_call.1} parent=1 // loop_body
      %s26 = ssub.s32 %s21, 1
      %s27 = ssub.s32 %s21, 2
      %s34 = sadd.s32 1, %s29
      %p35 = scmp.ge.s32.totalorder %s34, 2
      %s36 = scalar_select %p35, 0, %s34
      %s37 = sadd.s32 1, %s28
      %s38 = scalar_select %p35, %s37, %s28
      %p39 = scmp.ge.s32.totalorder %s38, 2
      %s40 = scalar_select %p39, 0, %s38
      %s41 = ssub.s32 %s28, %s40
      %s42 = ssub.s32 %s29, %s36
      %s43 = sor.u32 %s41, %s42
      %p44 = scmp.eq.s32.totalorder %s43, 0
      %s46 = sadd.s32 %s45, 1
      %s47 = scalar_select %p44, %s45, %s46
      %p50 = pneg %p44
      %p51 = scmp.eq.s32.totalorder %s21, 3
      %p52 = por %p50, %p51
      %p53 = scmp.ne.s32.totalorder %s45, %s48
      %p54 = scmp.eq.s32.totalorder %s21, 0
      %p55 = por %p53, %p54
      %p56 = scmp.ne.s32.totalorder %s45, %s48
      %p57 = scmp.eq.s32.totalorder %s26, 3
      %p58 = por %p56, %p57
      %p59 = scmp.ne.s32.totalorder %s48, %s49
      %p60 = scmp.eq.s32.totalorder %s26, 0
      %p61 = por %p59, %p60
      %p62 = scmp.ne.s32.totalorder %s48, %s49
      %p63 = scmp.eq.s32.totalorder %s27, 3
      %p64 = por %p62, %p63
      %p66 = scmp.ne.s32.totalorder %s49, %s65
      %p67 = scmp.eq.s32.totalorder %s27, 0
      %p68 = por %p66, %p67
      %s70 = sadd.s32 %s69, 1
      %p73 = scmp.eq.s32.totalorder %s21, 3
      %p74 = scmp.ne.s32.totalorder %s69, %s71
      %p75 = scmp.eq.s32.totalorder %s21, 0
      %p76 = por %p74, %p75
      %p77 = scmp.ne.s32.totalorder %s69, %s71
      %p78 = scmp.eq.s32.totalorder %s26, 3
      %p79 = por %p77, %p78
      %p80 = scmp.ne.s32.totalorder %s71, %s72
      %p81 = scmp.eq.s32.totalorder %s26, 0
      %p82 = por %p80, %p81
      %p83 = scmp.ne.s32.totalorder %s71, %s72
      %p84 = scmp.eq.s32.totalorder %s27, 3
      %p85 = por %p83, %p84
      %p87 = scmp.ne.s32.totalorder %s72, %s86
      %p88 = scmp.eq.s32.totalorder %s27, 0
      %p89 = por %p87, %p88
      %s91 = sadd.s32 %s90, 1
      %p94 = scmp.eq.s32.totalorder %s21, 3
      %p95 = scmp.ne.s32.totalorder %s90, %s92
      %p96 = scmp.eq.s32.totalorder %s21, 0
      %p97 = por %p95, %p96
      %p98 = scmp.ne.s32.totalorder %s90, %s92
      %p99 = scmp.eq.s32.totalorder %s26, 3
      %p100 = por %p98, %p99
      %p101 = scmp.ne.s32.totalorder %s92, %s93
      %p102 = scmp.eq.s32.totalorder %s26, 0
      %p103 = por %p101, %p102
      %p104 = scmp.ne.s32.totalorder %s92, %s93
      %p105 = scmp.eq.s32.totalorder %s27, 3
      %p106 = por %p104, %p105
      %p108 = scmp.ne.s32.totalorder %s93, %s107
      %p109 = scmp.eq.s32.totalorder %s27, 0
      %p110 = por %p108, %p109
      %s112 = sadd.s32 %s111, 1
      %p115 = scmp.eq.s32.totalorder %s21, 3
      %p116 = scmp.ne.s32.totalorder %s111, %s113
      %p117 = scmp.eq.s32.totalorder %s21, 0
      %p118 = por %p116, %p117
      %p119 = scmp.ne.s32.totalorder %s111, %s113
      %p120 = scmp.eq.s32.totalorder %s26, 3
      %p121 = por %p119, %p120
      %p122 = scmp.ne.s32.totalorder %s113, %s114
      %p123 = scmp.eq.s32.totalorder %s26, 0
      %p124 = por %p122, %p123
      %p125 = scmp.ne.s32.totalorder %s113, %s114
      %p126 = scmp.eq.s32.totalorder %s27, 3
      %p127 = por %p125, %p126
      %p129 = scmp.ne.s32.totalorder %s114, %s128
      %p130 = scmp.eq.s32.totalorder %s27, 0
      %p131 = por %p129, %p130
      %s133 = sadd.s32 %s132, 1
      %p136 = scmp.eq.s32.totalorder %s21, 3
      %p137 = scmp.ne.s32.totalorder %s132, %s134
      %p138 = scmp.eq.s32.totalorder %s21, 0
      %p139 = por %p137, %p138
      %p140 = scmp.ne.s32.totalorder %s132, %s134
      %p141 = scmp.eq.s32.totalorder %s26, 3
      %p142 = por %p140, %p141
      %p143 = scmp.ne.s32.totalorder %s134, %s135
      %p144 = scmp.eq.s32.totalorder %s26, 0
      %p145 = por %p143, %p144
      %p146 = scmp.ne.s32.totalorder %s134, %s135
      %p147 = scmp.eq.s32.totalorder %s27, 3
      %p148 = por %p146, %p147
      %p150 = scmp.ne.s32.totalorder %s135, %s149
      %p151 = scmp.eq.s32.totalorder %s27, 0
      %p152 = por %p150, %p151
      %s154 = sadd.s32 %s153, 1
      %p157 = scmp.eq.s32.totalorder %s21, 3
      %p158 = scmp.ne.s32.totalorder %s153, %s155
      %p159 = scmp.eq.s32.totalorder %s21, 0
      %p160 = por %p158, %p159
      %p161 = scmp.ne.s32.totalorder %s153, %s155
      %p162 = scmp.eq.s32.totalorder %s26, 3
      %p163 = por %p161, %p162
      %p164 = scmp.ne.s32.totalorder %s155, %s156
      %p165 = scmp.eq.s32.totalorder %s26, 0
      %p166 = por %p164, %p165
      %p167 = scmp.ne.s32.totalorder %s155, %s156
      %p168 = scmp.eq.s32.totalorder %s27, 3
      %p169 = por %p167, %p168
      %p171 = scmp.ne.s32.totalorder %s156, %s170
      %p172 = scmp.eq.s32.totalorder %s27, 0
      %p173 = por %p171, %p172
      %s175 = sadd.s32 %s174, 1
      %p178 = scmp.eq.s32.totalorder %s21, 3
      %p179 = scmp.ne.s32.totalorder %s174, %s176
      %p180 = scmp.eq.s32.totalorder %s21, 0
      %p181 = por %p179, %p180
      %p182 = scmp.ne.s32.totalorder %s174, %s176
      %p183 = scmp.eq.s32.totalorder %s26, 3
      %p184 = por %p182, %p183
      %p185 = scmp.ne.s32.totalorder %s176, %s177
      %p186 = scmp.eq.s32.totalorder %s26, 0
      %p187 = por %p185, %p186
      %p188 = scmp.ne.s32.totalorder %s176, %s177
      %p189 = scmp.eq.s32.totalorder %s27, 3
      %p190 = por %p188, %p189
      %p192 = scmp.ne.s32.totalorder %s177, %s191
      %p193 = scmp.eq.s32.totalorder %s27, 0
      %p194 = por %p192, %p193
      %s195 = ssub.s32 %s28, %s40
      %s196 = ssub.s32 %s29, %s36
      %s197 = sor.u32 %s195, %s196
      %p198 = scmp.eq.s32.totalorder %s197, 0
      %s200 = sadd.s32 %s199, 1
      %s201 = scalar_select %p198, %s199, %s200
      %p204 = pneg %p198
      %p205 = scmp.eq.s32.totalorder %s21, 3
      %p206 = por %p204, %p205
      %p207 = scmp.ne.s32.totalorder %s199, %s202
      %p208 = scmp.eq.s32.totalorder %s21, 0
      %p209 = por %p207, %p208
      %p210 = scmp.ne.s32.totalorder %s199, %s202
      %p211 = scmp.eq.s32.totalorder %s26, 3
      %p212 = por %p210, %p211
      %p213 = scmp.ne.s32.totalorder %s202, %s203
      %p214 = scmp.eq.s32.totalorder %s26, 0
      %p215 = por %p213, %p214
      %p216 = scmp.ne.s32.totalorder %s202, %s203
      %p217 = scmp.eq.s32.totalorder %s27, 3
      %p218 = por %p216, %p217
      %p220 = scmp.ne.s32.totalorder %s203, %s219
      %p221 = scmp.eq.s32.totalorder %s27, 0
      %p222 = por %p220, %p221
      %p223 = scmp.le.s32.totalorder 1, %s21
      %p224 = scmp.lt.s32.totalorder %s21, 5
      %p225 = pnand %p223, %p224
      %p226 = pneg %p225
      // Predicated region
      $region9: #{tpu_custom_call.1} parent=5 // pred_check
        _
      $region10: #{tpu_custom_call.1} parent=5 // pred_check_branch
        %228 = sbr.rel (%p225) target = $region12
      $region11: #{tpu_custom_call.1} parent=5 // pred_region
        %s229 = ssub.s32 %s21, 1
        // Predicated region
        $region13: #{tpu_custom_call.1} parent=11 // pred_check
          %p230 = pneg %p82
        $region14: #{tpu_custom_call.1} parent=11 // pred_check_branch
          %232 = sbr.rel (%p230) target = $region16
        $region15: #{tpu_custom_call.1} parent=11 // pred_region
          _
        $region16: #{tpu_custom_call.1} parent=11 // pred_fallthru
          _
        // Predicated region
        $region17: #{tpu_custom_call.1} parent=11 // pred_check
          %p233 = pneg %p103
        $region18: #{tpu_custom_call.1} parent=11 // pred_check_branch
          %235 = sbr.rel (%p233) target = $region20
        $region19: #{tpu_custom_call.1} parent=11 // pred_region
          _
        $region20: #{tpu_custom_call.1} parent=11 // pred_fallthru
          _
        // Predicated region
        $region21: #{tpu_custom_call.1} parent=11 // pred_check
          %p236 = pneg %p124
        $region22: #{tpu_custom_call.1} parent=11 // pred_check_branch
          %238 = sbr.rel (%p236) target = $region24
        $region23: #{tpu_custom_call.1} parent=11 // pred_region
          _
        $region24: #{tpu_custom_call.1} parent=11 // pred_fallthru
          _
        // Predicated region
        $region25: #{tpu_custom_call.1} parent=11 // pred_check
          %p239 = pneg %p145
        $region26: #{tpu_custom_call.1} parent=11 // pred_check_branch
          %241 = sbr.rel (%p239) target = $region28
        $region27: #{tpu_custom_call.1} parent=11 // pred_region
          _
        $region28: #{tpu_custom_call.1} parent=11 // pred_fallthru
          _
        // Predicated region
        $region29: #{tpu_custom_call.1} parent=11 // pred_check
          %p242 = pneg %p166
        $region30: #{tpu_custom_call.1} parent=11 // pred_check_branch
          %244 = sbr.rel (%p242) target = $region32
        $region31: #{tpu_custom_call.1} parent=11 // pred_region
          %246 = vsyncadd [#allocation9], 0
          %s247 = sshll.u32 %s5, 4
          %s248 = int_to_ptr.hbm [resolvable:$true] %s247
          %s249 = sshll.u32 [#allocation8], 4
          %s250 = int_to_ptr.vmem [resolvable:$true] %s249
          %255 = dma.hbm_to_vmem [thread:$0]  %s248, 512, %s250, [#allocation9], 128, 128, 8
        $region32: #{tpu_custom_call.1} parent=11 // pred_fallthru
          _
        // Predicated region
        $region33: #{tpu_custom_call.1} parent=11 // pred_check
          %p256 = pneg %p187
        $region34: #{tpu_custom_call.1} parent=11 // pred_check_branch
          %258 = sbr.rel (%p256) target = $region36
        $region35: #{tpu_custom_call.1} parent=11 // pred_region
          _
        $region36: #{tpu_custom_call.1} parent=11 // pred_fallthru
          _
      $region12: #{tpu_custom_call.1} parent=5 // pred_fallthru
        _
      %p259 = scmp.lt.s32.totalorder %s21, 4
      // Predicated region
      $region37: #{tpu_custom_call.1} parent=5 // pred_check
        %p260 = pneg %p259
      $region38: #{tpu_custom_call.1} parent=5 // pred_check_branch
        %262 = sbr.rel (%p260) target = $region40
      $region39: #{tpu_custom_call.1} parent=5 // pred_region
        // Predicated region
        $region41: #{tpu_custom_call.1} parent=39 // pred_check
          %p263 = pneg %p55
        $region42: #{tpu_custom_call.1} parent=39 // pred_check_branch
          %265 = sbr.rel (%p263) target = $region44
        $region43: #{tpu_custom_call.1} parent=39 // pred_region
          %s266 = sand.u32 %s45, 1
          %s267 = scalar_lea.sflag [#allocation6], %s266
          %s268 = sand.u32 %s45, 1
          %s269 = smul.addr %s268, 5
          %s270 = scalar_lea.vmem [#allocation5], %s269
          %272 = vsyncadd %s267, 0
          %s273 = smul.addr %s29, 5
          %s274 = smul.addr %s28, 10
          %s275 = sadd.s32 %s273, %s274
          %s276 = scalar_lea.hbm %s0, %s275
          %s278 = sshll.u32 %s276, 4
          %s279 = int_to_ptr.hbm [resolvable:$true] %s278
          %s280 = sshll.u32 %s270, 4
          %s281 = int_to_ptr.vmem [resolvable:$true] %s280
          %283 = dma.hbm_to_vmem [thread:$0]  %s279, 80, %s281, %s267
        $region44: #{tpu_custom_call.1} parent=39 // pred_fallthru
          _
      $region40: #{tpu_custom_call.1} parent=5 // pred_fallthru
        _
      %p284 = scmp.le.s32.totalorder 1, %s21
      %p285 = scmp.lt.s32.totalorder %s21, 5
      %p286 = pnand %p284, %p285
      %p287 = pneg %p286
      // Predicated region
      $region45: #{tpu_custom_call.1} parent=5 // pred_check
        _
      $region46: #{tpu_custom_call.1} parent=5 // pred_check_branch
        %289 = sbr.rel (%p286) target = $region48
      $region47: #{tpu_custom_call.1} parent=5 // pred_region
        %s290 = ssub.s32 %s21, 1
        %s291 = sand.u32 %s48, 1
        %s292 = scalar_lea.sflag [#allocation6], %s291
        %s293 = sand.u32 %s48, 1
        %s294 = smul.addr %s293, 5
        %s295 = scalar_lea.vmem [#allocation5], %s294
        // Predicated region
        $region49: #{tpu_custom_call.1} parent=47 // pred_check
          %p296 = pneg %p61
        $region50: #{tpu_custom_call.1} parent=47 // pred_check_branch
          %298 = sbr.rel (%p296) target = $region52
        $region51: #{tpu_custom_call.1} parent=47 // pred_region
          %300 = dma.done %s292, 80
        $region52: #{tpu_custom_call.1} parent=47 // pred_fallthru
          _
        // Predicated region
        $region53: #{tpu_custom_call.1} parent=47 // pred_check
          %p301 = pneg %p166
        $region54: #{tpu_custom_call.1} parent=47 // pred_check_branch
          %303 = sbr.rel (%p301) target = $region56
        $region55: #{tpu_custom_call.1} parent=47 // pred_region
          %305 = dma.done [#allocation9], 512
        $region56: #{tpu_custom_call.1} parent=47 // pred_fallthru
          _
        %s306 = sand.u32 %s48, 1
        %s307 = scalar_lea.sflag [#allocation6], %s306
        %s308 = sand.u32 %s48, 1
        %s309 = smul.addr %s308, 5
        %s310 = scalar_lea.vmem [#allocation5], %s309
        %p311 = pneg %p61
        %p312 = pneg %p58
        %p313 = pneg %p82
        %p314 = pneg %p79
        %p315 = pneg %p103
        %p316 = pneg %p100
        %p317 = pneg %p124
        %p318 = pneg %p121
        %p319 = pneg %p145
        %p320 = pneg %p142
        %p321 = pneg %p166
        %p322 = pneg %p163
        %p323 = pneg %p187
        %p324 = pneg %p184
        %p325 = pneg %p215
        %p326 = pneg %p212
        %s327 = sand.u32 %s202, 1
        %s328 = scalar_lea.sflag [#allocation7], %s327
        %s329 = sand.u32 %s202, 1
        %s330 = smul.addr %s329, 2
        %s331 = scalar_lea.vmem [#allocation10], %s330
        %v332 = vld [vmem:[%s295] sm:$0x1f]
        %v333 = vlaneseq
        %vm334 = vcmp.ge.s32.totalorder %v333, 0
        %vm335 = vcmp.lt.s32.totalorder %v333, 352
        %vm336 = vmand %vm334, %vm335
        %337 = vst.msk [vmem:[#allocation2] ss:$8 sm:$0x7] %vm336, %v332
        %338 = vst.msk [vmem:[#allocation2] ss:$8 sm:$0x0] %vm336, %v332
        %340 = vrot.lane.b32.xlu0 %v332, 100
        %v341 = vpop.permute.xlu0 %340
        %v342 = vrot.slane %v341, 1
        %vm343 = vcmask 818176
        %v344 = vsel %vm343, %v341, %v342
        %s346 = scalar_lea.vmem [#allocation2], 1
        %347 = vst.msk [vmem:[%s346] ss:$8 sm:$0x7] %vm336, %v344
        %348 = vst.msk [vmem:[%s346] ss:$8 sm:$0x0] %vm336, %v344
        %349 = vrot.lane.b32.xlu0 %v332, 72
        %v350 = vpop.permute.xlu0 %349
        %v351 = vrot.slane %v350, 1
        %vm352 = vcmask 588800
        %v353 = vsel %vm352, %v350, %v351
        %s355 = scalar_lea.vmem [#allocation2], 2
        %356 = vst.msk [vmem:[%s355] ss:$8 sm:$0x7] %vm336, %v353
        %357 = vst.msk [vmem:[%s355] ss:$8 sm:$0x0] %vm336, %v353
        %358 = vrot.lane.b32.xlu0 %v332, 44
        %v359 = vpop.permute.xlu0 %358
        %v360 = vrot.slane %v359, 1
        %vm361 = vcmask 359424
        %v362 = vsel %vm361, %v359, %v360
        %s364 = scalar_lea.vmem [#allocation2], 3
        %365 = vst.msk [vmem:[%s364] ss:$8 sm:$0x7] %vm336, %v362
        %366 = vst.msk [vmem:[%s364] ss:$8 sm:$0x0] %vm336, %v362
        %367 = vrot.lane.b32.xlu0 %v332, 16
        %v368 = vpop.permute.xlu0 %367
        %v369 = vrot.slane %v368, 1
        %vm370 = vcmask 130048
        %v371 = vsel %vm370, %v368, %v369
        %s373 = scalar_lea.vmem [#allocation2], 4
        %374 = vst.msk [vmem:[%s373] ss:$8 sm:$0x7] %vm336, %v371
        %375 = vst.msk [vmem:[%s373] ss:$8 sm:$0x0] %vm336, %v371
        %376 = vrot.lane.b32.xlu0 %v332, 116
        %v377 = vpop.permute.xlu0 %376
        %v378 = vrot.slane %v377, 1
        %v379 = vrot.slane %v377, 2
        %vm380 = vcmask 949248
        %v381 = vsel %vm380, %v378, %v379
        %s383 = scalar_lea.vmem [#allocation2], 5
        %384 = vst.msk [vmem:[%s383] ss:$8 sm:$0x7] %vm336, %v381
        %385 = vst.msk [vmem:[%s383] ss:$8 sm:$0x0] %vm336, %v381
        %386 = vrot.lane.b32.xlu0 %v332, 88
        %v387 = vpop.permute.xlu0 %386
        %v388 = vrot.slane %v387, 1
        %v389 = vrot.slane %v387, 2
        %vm390 = vcmask 719872
        %v391 = vsel %vm390, %v388, %v389
        %s393 = scalar_lea.vmem [#allocation2], 6
        %394 = vst.msk [vmem:[%s393] ss:$8 sm:$0x7] %vm336, %v391
        %395 = vst.msk [vmem:[%s393] ss:$8 sm:$0x0] %vm336, %v391
        %396 = vrot.lane.b32.xlu0 %v332, 60
        %v397 = vpop.permute.xlu0 %396
        %v398 = vrot.slane %v397, 1
        %v399 = vrot.slane %v397, 2
        %vm400 = vcmask 490496
        %v401 = vsel %vm400, %v398, %v399
        %s403 = scalar_lea.vmem [#allocation2], 7
        %404 = vst.msk [vmem:[%s403] ss:$8 sm:$0x7] %vm336, %v401
        %405 = vst.msk [vmem:[%s403] ss:$8 sm:$0x0] %vm336, %v401
        %406 = vrot.lane.b32.xlu0 %v332, 32
        %v407 = vpop.permute.xlu0 %406
        %v408 = vrot.slane %v407, 1
        %v409 = vrot.slane %v407, 2
        %vm410 = vcmask 261120
        %v411 = vsel %vm410, %v408, %v409
        %s413 = scalar_lea.vmem [#allocation2], 24
        %414 = vst.msk [vmem:[%s413] ss:$8 sm:$0x7] %vm336, %v411
        %415 = vst.msk [vmem:[%s413] ss:$8 sm:$0x0] %vm336, %v411
        %v416 = vld [vmem:[#allocation2] sm:$0xff]
        %v417 = vld [vmem:[#allocation2 + $0x8] sm:$0xff]
        %v418 = vld [vmem:[#allocation2 + $0x10] sm:$0xff]
        %v419 = vld [vmem:[#allocation2 + $0x18] sm:$0x1]
        %v420 = vld [vmem:[#allocation2 + $0x20] sm:$0x1]
        %v421 = vld [vmem:[#allocation2 + $0x28] sm:$0x1]
        %422 = vst [vmem:[#allocation3] sm:$0xff] %v416
        %423 = vst [vmem:[#allocation3 + $0x8] sm:$0xff] %v417
        %424 = vst.msk [vmem:[#allocation3 + $0x10] sm:$0xff] %vm390, %v418
        %425 = vst [vmem:[#allocation3 + $0x18] sm:$0x1] %v419
        %426 = vst [vmem:[#allocation3 + $0x20] sm:$0x1] %v420
        %vm427 = vcmask 712704
        %428 = vst.msk [vmem:[#allocation3 + $0x28] sm:$0x1] %vm427, %v421
        %vm435 = vcmask 1040384
        %v436 = vrot.slane %v416, 7
        %v437 = vrot.slane %v417, 7
        %v438 = vrot.slane %v418, 7
        %v439 = vrot.slane %v419, 7
        %v440 = vsel %vm435, %v436, %v439
        %v441 = vrot.slane %v420, 7
        %v442 = vsel %vm435, %v437, %v441
        %v443 = vrot.slane %v421, 7
        %v444 = vsel %vm435, %v438, %v443
        %445 = vrot.lane.b32.xlu0 %v436, 127
        %v446 = vpop.permute.xlu0 %445
        %447 = vrot.lane.b32.xlu0 %v437, 127
        %v448 = vpop.permute.xlu0 %447
        %449 = vrot.lane.b32.xlu0 %v438, 127
        %v450 = vpop.permute.xlu0 %449
        %451 = vrot.lane.b32.xlu0 %v440, 127
        %v452 = vpop.permute.xlu0 %451
        %453 = vrot.lane.b32.xlu0 %v442, 127
        %v454 = vpop.permute.xlu0 %453
        %455 = vrot.lane.b32.xlu0 %v444, 127
        %v456 = vpop.permute.xlu0 %455
        %vm457 = vcmask 1039360
        %v458 = vsel %vm457, %v446, %v448
        %v459 = vsel %vm457, %v448, %v450
        %v460 = vsel %vm457, %v452, %v454
        %v461 = vsel %vm457, %v454, %v456
        %468 = vst [vmem:[#allocation3 + $0x18] sm:$0xfe] %v458
        %469 = vst [vmem:[#allocation3 + $0x20] sm:$0xfe] %v459
        %vm470 = vcmask 719873
        %471 = vst.msk [vmem:[#allocation3 + $0x28] sm:$0xfe] %vm470, %v450
        %472 = vst [vmem:[#allocation3 + $0x30] sm:$0x3] %v460
        %473 = vst [vmem:[#allocation3 + $0x38] sm:$0x3] %v461
        %vm474 = vcmask 713728
        %475 = vst.msk [vmem:[#allocation3 + $0x40] sm:$0x3] %vm474, %v456
        %vm476 = vcmask 1041408
        %v477 = vrot.slane %v416, 6
        %v478 = vrot.slane %v417, 6
        %v479 = vrot.slane %v418, 6
        %v480 = vrot.slane %v419, 6
        %v481 = vsel %vm476, %v477, %v480
        %v482 = vrot.slane %v420, 6
        %v483 = vsel %vm476, %v478, %v482
        %v484 = vrot.slane %v421, 6
        %v485 = vsel %vm476, %v479, %v484
        %486 = vrot.lane.b32.xlu0 %v477, 126
        %v487 = vpop.permute.xlu0 %486
        %488 = vrot.lane.b32.xlu0 %v478, 126
        %v489 = vpop.permute.xlu0 %488
        %490 = vrot.lane.b32.xlu0 %v479, 126
        %v491 = vpop.permute.xlu0 %490
        %492 = vrot.lane.b32.xlu0 %v481, 126
        %v493 = vpop.permute.xlu0 %492
        %494 = vrot.lane.b32.xlu0 %v483, 126
        %v495 = vpop.permute.xlu0 %494
        %496 = vrot.lane.b32.xlu0 %v485, 126
        %v497 = vpop.permute.xlu0 %496
        %vm498 = vcmask 1031168
        %v499 = vsel %vm498, %v487, %v489
        %v500 = vsel %vm498, %v489, %v491
        %v501 = vsel %vm498, %v493, %v495
        %v502 = vsel %vm498, %v495, %v497
        %509 = vst [vmem:[#allocation3 + $0x30] sm:$0xfc] %v499
        %510 = vst [vmem:[#allocation3 + $0x38] sm:$0xfc] %v500
        %vm511 = vcmask 719874
        %512 = vst.msk [vmem:[#allocation3 + $0x40] sm:$0xfc] %vm511, %v491
        %513 = vst [vmem:[#allocation3 + $0x48] sm:$0x7] %v501
        %514 = vst [vmem:[#allocation3 + $0x50] sm:$0x7] %v502
        %vm515 = vcmask 714752
        %516 = vst.msk [vmem:[#allocation3 + $0x58] sm:$0x7] %vm515, %v497
        %vm517 = vcmask 1042432
        %v518 = vrot.slane %v416, 5
        %v519 = vrot.slane %v417, 5
        %v520 = vrot.slane %v418, 5
        %v521 = vrot.slane %v419, 5
        %v522 = vsel %vm517, %v518, %v521
        %v523 = vrot.slane %v420, 5
        %v524 = vsel %vm517, %v519, %v523
        %v525 = vrot.slane %v421, 5
        %v526 = vsel %vm517, %v520, %v525
        %527 = vrot.lane.b32.xlu0 %v518, 125
        %v528 = vpop.permute.xlu0 %527
        %529 = vrot.lane.b32.xlu0 %v519, 125
        %v530 = vpop.permute.xlu0 %529
        %531 = vrot.lane.b32.xlu0 %v520, 125
        %v532 = vpop.permute.xlu0 %531
        %533 = vrot.lane.b32.xlu0 %v522, 125
        %v534 = vpop.permute.xlu0 %533
        %535 = vrot.lane.b32.xlu0 %v524, 125
        %v536 = vpop.permute.xlu0 %535
        %537 = vrot.lane.b32.xlu0 %v526, 125
        %v538 = vpop.permute.xlu0 %537
        %vm539 = vcmask 1022976
        %v540 = vsel %vm539, %v528, %v530
        %v541 = vsel %vm539, %v530, %v532
        %v542 = vsel %vm539, %v534, %v536
        %v543 = vsel %vm539, %v536, %v538
        %550 = vst [vmem:[#allocation3 + $0x48] sm:$0xf8] %v540
        %551 = vst [vmem:[#allocation3 + $0x50] sm:$0xf8] %v541
        %vm552 = vcmask 719875
        %553 = vst.msk [vmem:[#allocation3 + $0x58] sm:$0xf8] %vm552, %v532
        %554 = vst [vmem:[#allocation3 + $0x60] sm:$0xf] %v542
        %555 = vst [vmem:[#allocation3 + $0x68] sm:$0xf] %v543
        %vm556 = vcmask 715776
        %557 = vst.msk [vmem:[#allocation3 + $0x70] sm:$0xf] %vm556, %v538
        %vm558 = vcmask 1043456
        %v559 = vrot.slane %v416, 4
        %v560 = vrot.slane %v417, 4
        %v561 = vrot.slane %v418, 4
        %v562 = vrot.slane %v419, 4
        %v563 = vsel %vm558, %v559, %v562
        %v564 = vrot.slane %v420, 4
        %v565 = vsel %vm558, %v560, %v564
        %v566 = vrot.slane %v421, 4
        %v567 = vsel %vm558, %v561, %v566
        %568 = vrot.lane.b32.xlu0 %v559, 124
        %v569 = vpop.permute.xlu0 %568
        %570 = vrot.lane.b32.xlu0 %v560, 124
        %v571 = vpop.permute.xlu0 %570
        %572 = vrot.lane.b32.xlu0 %v561, 124
        %v573 = vpop.permute.xlu0 %572
        %574 = vrot.lane.b32.xlu0 %v563, 124
        %v575 = vpop.permute.xlu0 %574
        %576 = vrot.lane.b32.xlu0 %v565, 124
        %v577 = vpop.permute.xlu0 %576
        %578 = vrot.lane.b32.xlu0 %v567, 124
        %v579 = vpop.permute.xlu0 %578
        %vm580 = vcmask 1014784
        %v581 = vsel %vm580, %v569, %v571
        %v582 = vsel %vm580, %v571, %v573
        %v583 = vsel %vm580, %v575, %v577
        %v584 = vsel %vm580, %v577, %v579
        %591 = vst [vmem:[#allocation3 + $0x60] sm:$0xf0] %v581
        %592 = vst [vmem:[#allocation3 + $0x68] sm:$0xf0] %v582
        %vm593 = vcmask 719876
        %594 = vst.msk [vmem:[#allocation3 + $0x70] sm:$0xf0] %vm593, %v573
        %595 = vst [vmem:[#allocation3 + $0x78] sm:$0x1f] %v583
        %596 = vst [vmem:[#allocation3 + $0x80] sm:$0x1f] %v584
        %vm597 = vcmask 716800
        %598 = vst.msk [vmem:[#allocation3 + $0x88] sm:$0x1f] %vm597, %v579
        %vm599 = vcmask 1044480
        %v600 = vrot.slane %v416, 3
        %v601 = vrot.slane %v417, 3
        %v602 = vrot.slane %v418, 3
        %v603 = vrot.slane %v419, 3
        %v604 = vsel %vm599, %v600, %v603
        %v605 = vrot.slane %v420, 3
        %v606 = vsel %vm599, %v601, %v605
        %v607 = vrot.slane %v421, 3
        %v608 = vsel %vm599, %v602, %v607
        %609 = vrot.lane.b32.xlu0 %v600, 123
        %v610 = vpop.permute.xlu0 %609
        %611 = vrot.lane.b32.xlu0 %v601, 123
        %v612 = vpop.permute.xlu0 %611
        %613 = vrot.lane.b32.xlu0 %v602, 123
        %v614 = vpop.permute.xlu0 %613
        %615 = vrot.lane.b32.xlu0 %v604, 123
        %v616 = vpop.permute.xlu0 %615
        %617 = vrot.lane.b32.xlu0 %v606, 123
        %v618 = vpop.permute.xlu0 %617
        %619 = vrot.lane.b32.xlu0 %v608, 123
        %v620 = vpop.permute.xlu0 %619
        %vm621 = vcmask 1006592
        %v622 = vsel %vm621, %v610, %v612
        %v623 = vsel %vm621, %v612, %v614
        %v624 = vsel %vm621, %v616, %v618
        %v625 = vsel %vm621, %v618, %v620
        %632 = vst [vmem:[#allocation3 + $0x78] sm:$0xe0] %v622
        %633 = vst [vmem:[#allocation3 + $0x80] sm:$0xe0] %v623
        %vm634 = vcmask 719877
        %635 = vst.msk [vmem:[#allocation3 + $0x88] sm:$0xe0] %vm634, %v614
        %636 = vst [vmem:[#allocation3 + $0x90] sm:$0x3f] %v624
        %637 = vst [vmem:[#allocation3 + $0x98] sm:$0x3f] %v625
        %vm638 = vcmask 717824
        %639 = vst.msk [vmem:[#allocation3 + $0xa0] sm:$0x3f] %vm638, %v620
        %vm640 = vcmask 1045504
        %v641 = vrot.slane %v416, 2
        %v642 = vrot.slane %v417, 2
        %v643 = vrot.slane %v418, 2
        %v644 = vrot.slane %v419, 2
        %v645 = vsel %vm640, %v641, %v644
        %v646 = vrot.slane %v420, 2
        %v647 = vsel %vm640, %v642, %v646
        %v648 = vrot.slane %v421, 2
        %v649 = vsel %vm640, %v643, %v648
        %650 = vrot.lane.b32.xlu0 %v641, 122
        %v651 = vpop.permute.xlu0 %650
        %652 = vrot.lane.b32.xlu0 %v642, 122
        %v653 = vpop.permute.xlu0 %652
        %654 = vrot.lane.b32.xlu0 %v643, 122
        %v655 = vpop.permute.xlu0 %654
        %656 = vrot.lane.b32.xlu0 %v645, 122
        %v657 = vpop.permute.xlu0 %656
        %658 = vrot.lane.b32.xlu0 %v647, 122
        %v659 = vpop.permute.xlu0 %658
        %660 = vrot.lane.b32.xlu0 %v649, 122
        %v661 = vpop.permute.xlu0 %660
        %vm662 = vcmask 998400
        %v663 = vsel %vm662, %v651, %v653
        %v664 = vsel %vm662, %v653, %v655
        %v665 = vsel %vm662, %v657, %v659
        %v666 = vsel %vm662, %v659, %v661
        %673 = vst [vmem:[#allocation3 + $0x90] sm:$0xc0] %v663
        %674 = vst [vmem:[#allocation3 + $0x98] sm:$0xc0] %v664
        %vm675 = vcmask 719878
        %676 = vst.msk [vmem:[#allocation3 + $0xa0] sm:$0xc0] %vm675, %v655
        %677 = vst [vmem:[#allocation3 + $0xa8] sm:$0x7f] %v665
        %678 = vst [vmem:[#allocation3 + $0xb0] sm:$0x7f] %v666
        %vm679 = vcmask 718848
        %680 = vst.msk [vmem:[#allocation3 + $0xb8] sm:$0x7f] %vm679, %v661
        %vm681 = vcmask 1046528
        %v682 = vrot.slane %v416, 1
        %v683 = vrot.slane %v417, 1
        %v684 = vrot.slane %v418, 1
        %v685 = vrot.slane %v419, 1
        %v686 = vsel %vm681, %v682, %v685
        %v687 = vrot.slane %v420, 1
        %v688 = vsel %vm681, %v683, %v687
        %v689 = vrot.slane %v421, 1
        %v690 = vsel %vm681, %v684, %v689
        %691 = vrot.lane.b32.xlu0 %v682, 121
        %v692 = vpop.permute.xlu0 %691
        %693 = vrot.lane.b32.xlu0 %v683, 121
        %v694 = vpop.permute.xlu0 %693
        %695 = vrot.lane.b32.xlu0 %v684, 121
        %v696 = vpop.permute.xlu0 %695
        %697 = vrot.lane.b32.xlu0 %v686, 121
        %v698 = vpop.permute.xlu0 %697
        %699 = vrot.lane.b32.xlu0 %v688, 121
        %v700 = vpop.permute.xlu0 %699
        %701 = vrot.lane.b32.xlu0 %v690, 121
        %v702 = vpop.permute.xlu0 %701
        %vm703 = vcmask 990208
        %v704 = vsel %vm703, %v692, %v694
        %v705 = vsel %vm703, %v694, %v696
        %v706 = vsel %vm703, %v698, %v700
        %v707 = vsel %vm703, %v700, %v702
        %714 = vst [vmem:[#allocation3 + $0xa8] sm:$0x80] %v704
        %715 = vst [vmem:[#allocation3 + $0xb0] sm:$0x80] %v705
        %vm716 = vcmask 719879
        %717 = vst.msk [vmem:[#allocation3 + $0xb8] sm:$0x80] %vm716, %v696
        %718 = vst [vmem:[#allocation3 + $0xc0] sm:$0xff] %v706
        %719 = vst [vmem:[#allocation3 + $0xc8] sm:$0xff] %v707
        %720 = vst.msk [vmem:[#allocation3 + $0xd0] sm:$0xff] %vm390, %v702
        %721 = vrot.lane.b32.xlu0 %v416, 120
        %v722 = vpop.permute.xlu0 %721
        %723 = vrot.lane.b32.xlu0 %v417, 120
        %v724 = vpop.permute.xlu0 %723
        %725 = vrot.lane.b32.xlu0 %v418, 120
        %v726 = vpop.permute.xlu0 %725
        %727 = vrot.lane.b32.xlu0 %v419, 120
        %v728 = vpop.permute.xlu0 %727
        %729 = vrot.lane.b32.xlu0 %v420, 120
        %v730 = vpop.permute.xlu0 %729
        %731 = vrot.lane.b32.xlu0 %v421, 120
        %v732 = vpop.permute.xlu0 %731
        %vm733 = vcmask 982016
        %v734 = vsel %vm733, %v722, %v724
        %v735 = vsel %vm733, %v724, %v726
        %v736 = vsel %vm733, %v728, %v730
        %v737 = vsel %vm733, %v730, %v732
        %744 = vst [vmem:[#allocation3 + $0xd8] sm:$0xff] %v734
        %745 = vst [vmem:[#allocation3 + $0xe0] sm:$0xff] %v735
        %746 = vst.msk [vmem:[#allocation3 + $0xe8] sm:$0xff] %vm390, %v726
        %747 = vst [vmem:[#allocation3 + $0xf0] sm:$0x1] %v736
        %748 = vst [vmem:[#allocation3 + $0xf8] sm:$0x1] %v737
        %749 = vst.msk [vmem:[#allocation3 + $0x100] sm:$0x1] %vm427, %v732
        %v750 = vld [vmem:[#allocation3] sm:$0xff]
        %v751 = vld [vmem:[#allocation3 + $0x8] sm:$0xff]
        %v752 = vld [vmem:[#allocation3 + $0x10] sm:$0xff]
        %v753 = vld [vmem:[#allocation3 + $0x18] sm:$0xff]
        %v754 = vld [vmem:[#allocation3 + $0x20] sm:$0xff]
        %v755 = vld [vmem:[#allocation3 + $0x28] sm:$0xff]
        %v756 = vld [vmem:[#allocation3 + $0x30] sm:$0xff]
        %v757 = vld [vmem:[#allocation3 + $0x38] sm:$0xff]
        %v758 = vld [vmem:[#allocation3 + $0x40] sm:$0xff]
        %v759 = vld [vmem:[#allocation3 + $0x48] sm:$0xff]
        %v760 = vld [vmem:[#allocation3 + $0x50] sm:$0xff]
        %v761 = vld [vmem:[#allocation3 + $0x58] sm:$0xff]
        %v762 = vld [vmem:[#allocation3 + $0x60] sm:$0xff]
        %v763 = vld [vmem:[#allocation3 + $0x68] sm:$0xff]
        %v764 = vld [vmem:[#allocation3 + $0x70] sm:$0xff]
        %v765 = vld [vmem:[#allocation3 + $0x78] sm:$0xff]
        %v766 = vld [vmem:[#allocation3 + $0x80] sm:$0xff]
        %v767 = vld [vmem:[#allocation3 + $0x88] sm:$0xff]
        %v768 = vld [vmem:[#allocation3 + $0x90] sm:$0xff]
        %v769 = vld [vmem:[#allocation3 + $0x98] sm:$0xff]
        %v770 = vld [vmem:[#allocation3 + $0xa0] sm:$0xff]
        %v771 = vld [vmem:[#allocation3 + $0xa8] sm:$0xff]
        %v772 = vld [vmem:[#allocation3 + $0xb0] sm:$0xff]
        %v773 = vld [vmem:[#allocation3 + $0xb8] sm:$0xff]
        %v774 = vld [vmem:[#allocation3 + $0xc0] sm:$0xff]
        %v775 = vld [vmem:[#allocation3 + $0xc8] sm:$0xff]
        %v776 = vld [vmem:[#allocation3 + $0xd0] sm:$0xff]
        %v777 = vld [vmem:[#allocation3 + $0xd8] sm:$0xff]
        %v778 = vld [vmem:[#allocation3 + $0xe0] sm:$0xff]
        %v779 = vld [vmem:[#allocation3 + $0xe8] sm:$0xff]
        %v780 = vld [vmem:[#allocation3 + $0xf0] sm:$0x1]
        %v781 = vld [vmem:[#allocation3 + $0xf8] sm:$0x1]
        %v782 = vld [vmem:[#allocation3 + $0x100] sm:$0x1]
        %v783 = vld [vmem:[%s1] sm:$0xff]
        %v784 = vld [vmem:[%s1 + $0x8] sm:$0xff]
        %v785 = vld [vmem:[%s1 + $0x10] sm:$0xff]
        %v786 = vld [vmem:[%s1 + $0x18] sm:$0xff]
        %v787 = vld [vmem:[%s1 + $0x20] sm:$0xff]
        %v788 = vld [vmem:[%s1 + $0x28] sm:$0xff]
        %v789 = vld [vmem:[%s1 + $0x30] sm:$0xff]
        %v790 = vld [vmem:[%s1 + $0x38] sm:$0xff]
        %v791 = vld [vmem:[%s2] sm:$0xff]
        %v792 = vld [vmem:[%s2 + $0x8] sm:$0xff]
        %v793 = vld [vmem:[%s2 + $0x10] sm:$0xff]
        %v794 = vld [vmem:[%s2 + $0x18] sm:$0xff]
        %v795 = vld [vmem:[%s2 + $0x20] sm:$0xff]
        %v796 = vld [vmem:[%s2 + $0x28] sm:$0xff]
        %v797 = vld [vmem:[%s2 + $0x30] sm:$0xff]
        %v798 = vld [vmem:[%s2 + $0x38] sm:$0xff]
        %800 = vset.pattern.permute.xlu0 0
        %801 = vperm.xlu0 %800, %v791
        %v802 = vpop.permute.xlu0 %801
        %805 = vset.pattern.permute.xlu0 0
        %806 = vperm.xlu0 %805, %v792
        %v807 = vpop.permute.xlu0 %806
        %810 = vset.pattern.permute.xlu0 0
        %811 = vperm.xlu0 %810, %v793
        %v812 = vpop.permute.xlu0 %811
        %815 = vset.pattern.permute.xlu0 0
        %816 = vperm.xlu0 %815, %v794
        %v817 = vpop.permute.xlu0 %816
        %820 = vset.pattern.permute.xlu0 0
        %821 = vperm.xlu0 %820, %v795
        %v822 = vpop.permute.xlu0 %821
        %825 = vset.pattern.permute.xlu0 0
        %826 = vperm.xlu0 %825, %v796
        %v827 = vpop.permute.xlu0 %826
        %830 = vset.pattern.permute.xlu0 0
        %831 = vperm.xlu0 %830, %v797
        %v832 = vpop.permute.xlu0 %831
        %835 = vset.pattern.permute.xlu0 0
        %836 = vperm.xlu0 %835, %v798
        %v837 = vpop.permute.xlu0 %836
        %vm839 = vcmask 662528
        %v841 = vsel %vm839, %v783, 0
        %v844 = vsel %vm839, %v784, 0
        %v847 = vsel %vm839, %v785, 0
        %v850 = vsel %vm839, %v786, 0
        %v853 = vsel %vm839, %v787, 0
        %v856 = vsel %vm839, %v788, 0
        %v859 = vsel %vm839, %v789, 0
        %v862 = vsel %vm839, %v790, 0
        %v865 = vsel %vm435, %v780, 0
        %v868 = vsel %vm435, %v781, 0
        %v871 = vsel %vm435, %v782, 0
        %873 = vmatpush.msra.mxu0 0.0
        %874 = vmatpush.msra.mxu0 0.0
        %875 = vmatpush.msra.mxu0 0.0
        %876 = vmatpush.msra.mxu0 0.0
        %877 = vmatpush.msra.mxu0 0.0
        %878 = vmatpush.msra.mxu0 %v865
        %879 = vmatpush.msra.mxu0 %v777
        %880 = vmatpush.msra.mxu0 %v774
        %881 = vmatpush.msra.mxu0 %v771
        %882 = vmatpush.msra.mxu0 %v768
        %883 = vmatpush.msra.mxu0 %v765
        %884 = vmatpush.msra.mxu0 %v762
        %885 = vmatpush.msra.mxu0 %v759
        %886 = vmatpush.msra.mxu0 %v756
        %887 = vmatpush.msra.mxu0 %v753
        %888 = vmatpush.msra.mxu0 %v750
        %889 = vmatmul.f32.gmra.mxu0 %v841
        %v890 = vpop.f32.mrf.mxu0
        %v891 = vadd.f32 %v802, %v890
        %892 = vmatmul.f32.gmra.mxu0 %v844
        %v893 = vpop.f32.mrf.mxu0
        %v894 = vadd.f32 %v807, %v893
        %895 = vmatmul.f32.gmra.mxu0 %v847
        %v896 = vpop.f32.mrf.mxu0
        %v897 = vadd.f32 %v812, %v896
        %898 = vmatmul.f32.gmra.mxu0 %v850
        %v899 = vpop.f32.mrf.mxu0
        %v900 = vadd.f32 %v817, %v899
        %901 = vmatmul.f32.gmra.mxu0 %v853
        %v902 = vpop.f32.mrf.mxu0
        %v903 = vadd.f32 %v822, %v902
        %904 = vmatmul.f32.gmra.mxu0 %v856
        %v905 = vpop.f32.mrf.mxu0
        %v906 = vadd.f32 %v827, %v905
        %907 = vmatmul.f32.gmra.mxu0 %v859
        %v908 = vpop.f32.mrf.mxu0
        %v909 = vadd.f32 %v832, %v908
        %910 = vmatmul.f32.gmra.mxu0 %v862
        %v911 = vpop.f32.mrf.mxu0
        %v912 = vadd.f32 %v837, %v911
        %913 = vdwg.mxu0
        %914 = vmatpush.msra.mxu0 0.0
        %915 = vmatpush.msra.mxu0 0.0
        %916 = vmatpush.msra.mxu0 0.0
        %917 = vmatpush.msra.mxu0 0.0
        %918 = vmatpush.msra.mxu0 0.0
        %919 = vmatpush.msra.mxu0 %v868
        %920 = vmatpush.msra.mxu0 %v778
        %921 = vmatpush.msra.mxu0 %v775
        %922 = vmatpush.msra.mxu0 %v772
        %923 = vmatpush.msra.mxu0 %v769
        %924 = vmatpush.msra.mxu0 %v766
        %925 = vmatpush.msra.mxu0 %v763
        %926 = vmatpush.msra.mxu0 %v760
        %927 = vmatpush.msra.mxu0 %v757
        %928 = vmatpush.msra.mxu0 %v754
        %929 = vmatpush.msra.mxu0 %v751
        %930 = vmatmul.f32.gmra.mxu0 %v841
        %v931 = vpop.f32.mrf.mxu0
        %v932 = vadd.f32 %v802, %v931
        %933 = vmatmul.f32.gmra.mxu0 %v844
        %v934 = vpop.f32.mrf.mxu0
        %v935 = vadd.f32 %v807, %v934
        %936 = vmatmul.f32.gmra.mxu0 %v847
        %v937 = vpop.f32.mrf.mxu0
        %v938 = vadd.f32 %v812, %v937
        %939 = vmatmul.f32.gmra.mxu0 %v850
        %v940 = vpop.f32.mrf.mxu0
        %v941 = vadd.f32 %v817, %v940
        %942 = vmatmul.f32.gmra.mxu0 %v853
        %v943 = vpop.f32.mrf.mxu0
        %v944 = vadd.f32 %v822, %v943
        %945 = vmatmul.f32.gmra.mxu0 %v856
        %v946 = vpop.f32.mrf.mxu0
        %v947 = vadd.f32 %v827, %v946
        %948 = vmatmul.f32.gmra.mxu0 %v859
        %v949 = vpop.f32.mrf.mxu0
        %v950 = vadd.f32 %v832, %v949
        %951 = vmatmul.f32.gmra.mxu0 %v862
        %v952 = vpop.f32.mrf.mxu0
        %v953 = vadd.f32 %v837, %v952
        %954 = vdwg.mxu0
        %955 = vmatpush.msra.mxu0 0.0
        %956 = vmatpush.msra.mxu0 0.0
        %957 = vmatpush.msra.mxu0 0.0
        %958 = vmatpush.msra.mxu0 0.0
        %959 = vmatpush.msra.mxu0 0.0
        %960 = vmatpush.msra.mxu0 %v871
        %961 = vmatpush.msra.mxu0 %v779
        %962 = vmatpush.msra.mxu0 %v776
        %963 = vmatpush.msra.mxu0 %v773
        %964 = vmatpush.msra.mxu0 %v770
        %965 = vmatpush.msra.mxu0 %v767
        %966 = vmatpush.msra.mxu0 %v764
        %967 = vmatpush.msra.mxu0 %v761
        %968 = vmatpush.msra.mxu0 %v758
        %969 = vmatpush.msra.mxu0 %v755
        %970 = vmatpush.msra.mxu0 %v752
        %971 = vmatmul.f32.gmra.mxu0 %v841
        %v972 = vpop.f32.mrf.mxu0
        %v973 = vadd.f32 %v802, %v972
        %974 = vmatmul.f32.gmra.mxu0 %v844
        %v975 = vpop.f32.mrf.mxu0
        %v976 = vadd.f32 %v807, %v975
        %977 = vmatmul.f32.gmra.mxu0 %v847
        %v978 = vpop.f32.mrf.mxu0
        %v979 = vadd.f32 %v812, %v978
        %980 = vmatmul.f32.gmra.mxu0 %v850
        %v981 = vpop.f32.mrf.mxu0
        %v982 = vadd.f32 %v817, %v981
        %983 = vmatmul.f32.gmra.mxu0 %v853
        %v984 = vpop.f32.mrf.mxu0
        %v985 = vadd.f32 %v822, %v984
        %986 = vmatmul.f32.gmra.mxu0 %v856
        %v987 = vpop.f32.mrf.mxu0
        %v988 = vadd.f32 %v827, %v987
        %989 = vmatmul.f32.gmra.mxu0 %v859
        %v990 = vpop.f32.mrf.mxu0
        %v991 = vadd.f32 %v832, %v990
        %992 = vmatmul.f32.gmra.mxu0 %v862
        %v993 = vpop.f32.mrf.mxu0
        %v994 = vadd.f32 %v837, %v993
        %995 = vdwg.mxu0
        %v996 = vmax.f32 %v891, 0.0
        %v997 = vmax.f32 %v932, 0.0
        %v998 = vmax.f32 %v973, 0.0
        %v999 = vmax.f32 %v894, 0.0
        %v1000 = vmax.f32 %v935, 0.0
        %v1001 = vmax.f32 %v976, 0.0
        %v1002 = vmax.f32 %v897, 0.0
        %v1003 = vmax.f32 %v938, 0.0
        %v1004 = vmax.f32 %v979, 0.0
        %v1005 = vmax.f32 %v900, 0.0
        %v1006 = vmax.f32 %v941, 0.0
        %v1007 = vmax.f32 %v982, 0.0
        %v1008 = vmax.f32 %v903, 0.0
        %v1009 = vmax.f32 %v944, 0.0
        %v1010 = vmax.f32 %v985, 0.0
        %v1011 = vmax.f32 %v906, 0.0
        %v1012 = vmax.f32 %v947, 0.0
        %v1013 = vmax.f32 %v988, 0.0
        %v1014 = vmax.f32 %v909, 0.0
        %v1015 = vmax.f32 %v950, 0.0
        %v1016 = vmax.f32 %v991, 0.0
        %v1017 = vmax.f32 %v912, 0.0
        %v1018 = vmax.f32 %v953, 0.0
        %v1019 = vmax.f32 %v994, 0.0
        %v1020 = vld [vmem:[%s3] sm:$0xff]
        %v1021 = vld [vmem:[%s3 + $0x8] sm:$0xff]
        %v1022 = vld [vmem:[%s3 + $0x10] sm:$0xff]
        %v1023 = vld [vmem:[%s3 + $0x18] sm:$0xff]
        %v1024 = vld [vmem:[%s4] sm:$0xff]
        %v1025 = vld [vmem:[%s4 + $0x8] sm:$0xff]
        %v1026 = vld [vmem:[%s4 + $0x10] sm:$0xff]
        %v1027 = vld [vmem:[%s4 + $0x18] sm:$0xff]
        %1029 = vset.pattern.permute.xlu0 0
        %1030 = vperm.xlu0 %1029, %v1024
        %v1031 = vpop.permute.xlu0 %1030
        %1034 = vset.pattern.permute.xlu0 0
        %1035 = vperm.xlu0 %1034, %v1025
        %v1036 = vpop.permute.xlu0 %1035
        %1039 = vset.pattern.permute.xlu0 0
        %1040 = vperm.xlu0 %1039, %v1026
        %v1041 = vpop.permute.xlu0 %1040
        %1044 = vset.pattern.permute.xlu0 0
        %1045 = vperm.xlu0 %1044, %v1027
        %v1046 = vpop.permute.xlu0 %1045
        %vm1048 = vcmask 523264
        %v1050 = vsel %vm1048, %v1020, 0
        %v1053 = vsel %vm1048, %v1021, 0
        %v1056 = vsel %vm1048, %v1022, 0
        %v1059 = vsel %vm1048, %v1023, 0
        %1061 = vmatpush.msra.mxu0 0.0
        %1062 = vmatpush.msra.mxu0 0.0
        %1063 = vmatpush.msra.mxu0 0.0
        %1064 = vmatpush.msra.mxu0 0.0
        %1065 = vmatpush.msra.mxu0 0.0
        %1066 = vmatpush.msra.mxu0 0.0
        %1067 = vmatpush.msra.mxu0 0.0
        %1068 = vmatpush.msra.mxu0 0.0
        %1069 = vmatpush.msra.mxu0 %v1017
        %1070 = vmatpush.msra.mxu0 %v1014
        %1071 = vmatpush.msra.mxu0 %v1011
        %1072 = vmatpush.msra.mxu0 %v1008
        %1073 = vmatpush.msra.mxu0 %v1005
        %1074 = vmatpush.msra.mxu0 %v1002
        %1075 = vmatpush.msra.mxu0 %v999
        %1076 = vmatpush.msra.mxu0 %v996
        %1077 = vmatmul.f32.gmra.mxu0 %v1050
        %v1078 = vpop.f32.mrf.mxu0
        %v1079 = vadd.f32 %v1031, %v1078
        %1080 = vmatmul.f32.gmra.mxu0 %v1053
        %v1081 = vpop.f32.mrf.mxu0
        %v1082 = vadd.f32 %v1036, %v1081
        %1083 = vmatmul.f32.gmra.mxu0 %v1056
        %v1084 = vpop.f32.mrf.mxu0
        %v1085 = vadd.f32 %v1041, %v1084
        %1086 = vmatmul.f32.gmra.mxu0 %v1059
        %v1087 = vpop.f32.mrf.mxu0
        %v1088 = vadd.f32 %v1046, %v1087
        %1089 = vdwg.mxu0
        %1090 = vmatpush.msra.mxu0 0.0
        %1091 = vmatpush.msra.mxu0 0.0
        %1092 = vmatpush.msra.mxu0 0.0
        %1093 = vmatpush.msra.mxu0 0.0
        %1094 = vmatpush.msra.mxu0 0.0
        %1095 = vmatpush.msra.mxu0 0.0
        %1096 = vmatpush.msra.mxu0 0.0
        %1097 = vmatpush.msra.mxu0 0.0
        %1098 = vmatpush.msra.mxu0 %v1018
        %1099 = vmatpush.msra.mxu0 %v1015
        %1100 = vmatpush.msra.mxu0 %v1012
        %1101 = vmatpush.msra.mxu0 %v1009
        %1102 = vmatpush.msra.mxu0 %v1006
        %1103 = vmatpush.msra.mxu0 %v1003
        %1104 = vmatpush.msra.mxu0 %v1000
        %1105 = vmatpush.msra.mxu0 %v997
        %1106 = vmatmul.f32.gmra.mxu0 %v1050
        %v1107 = vpop.f32.mrf.mxu0
        %v1108 = vadd.f32 %v1031, %v1107
        %1109 = vmatmul.f32.gmra.mxu0 %v1053
        %v1110 = vpop.f32.mrf.mxu0
        %v1111 = vadd.f32 %v1036, %v1110
        %1112 = vmatmul.f32.gmra.mxu0 %v1056
        %v1113 = vpop.f32.mrf.mxu0
        %v1114 = vadd.f32 %v1041, %v1113
        %1115 = vmatmul.f32.gmra.mxu0 %v1059
        %v1116 = vpop.f32.mrf.mxu0
        %v1117 = vadd.f32 %v1046, %v1116
        %1118 = vdwg.mxu0
        %1119 = vmatpush.msra.mxu0 0.0
        %1120 = vmatpush.msra.mxu0 0.0
        %1121 = vmatpush.msra.mxu0 0.0
        %1122 = vmatpush.msra.mxu0 0.0
        %1123 = vmatpush.msra.mxu0 0.0
        %1124 = vmatpush.msra.mxu0 0.0
        %1125 = vmatpush.msra.mxu0 0.0
        %1126 = vmatpush.msra.mxu0 0.0
        %1127 = vmatpush.msra.mxu0 %v1019
        %1128 = vmatpush.msra.mxu0 %v1016
        %1129 = vmatpush.msra.mxu0 %v1013
        %1130 = vmatpush.msra.mxu0 %v1010
        %1131 = vmatpush.msra.mxu0 %v1007
        %1132 = vmatpush.msra.mxu0 %v1004
        %1133 = vmatpush.msra.mxu0 %v1001
        %1134 = vmatpush.msra.mxu0 %v998
        %1135 = vmatmul.f32.gmra.mxu0 %v1050
        %v1136 = vpop.f32.mrf.mxu0
        %v1137 = vadd.f32 %v1031, %v1136
        %1138 = vmatmul.f32.gmra.mxu0 %v1053
        %v1139 = vpop.f32.mrf.mxu0
        %v1140 = vadd.f32 %v1036, %v1139
        %1141 = vmatmul.f32.gmra.mxu0 %v1056
        %v1142 = vpop.f32.mrf.mxu0
        %v1143 = vadd.f32 %v1041, %v1142
        %1144 = vmatmul.f32.gmra.mxu0 %v1059
        %v1145 = vpop.f32.mrf.mxu0
        %v1146 = vadd.f32 %v1046, %v1145
        %1147 = vdwg.mxu0
        %v1148 = vmax.f32 %v1079, 0.0
        %v1149 = vmax.f32 %v1108, 0.0
        %v1150 = vmax.f32 %v1137, 0.0
        %v1151 = vmax.f32 %v1082, 0.0
        %v1152 = vmax.f32 %v1111, 0.0
        %v1153 = vmax.f32 %v1140, 0.0
        %v1154 = vmax.f32 %v1085, 0.0
        %v1155 = vmax.f32 %v1114, 0.0
        %v1156 = vmax.f32 %v1143, 0.0
        %v1157 = vmax.f32 %v1088, 0.0
        %v1158 = vmax.f32 %v1117, 0.0
        %v1159 = vmax.f32 %v1146, 0.0
        %v1160 = vld [vmem:[#allocation8] sm:$0xff]
        %v1161 = vld [vmem:[#allocation8 + $0x8] sm:$0xff]
        %v1162 = vld [vmem:[#allocation8 + $0x10] sm:$0xff]
        %v1163 = vld [vmem:[#allocation8 + $0x18] sm:$0x1]
        %v1165 = vsel %vm410, %v1160, 0
        %v1168 = vsel %vm410, %v1161, 0
        %v1171 = vsel %vm410, %v1162, 0
        %v1174 = vsel %vm410, %v1163, 0
        %1176 = vmatpush.msra.mxu0 0.0
        %1177 = vmatpush.msra.mxu0 0.0
        %1178 = vmatpush.msra.mxu0 0.0
        %1179 = vmatpush.msra.mxu0 0.0
        %1180 = vmatpush.msra.mxu0 0.0
        %1181 = vmatpush.msra.mxu0 0.0
        %1182 = vmatpush.msra.mxu0 0.0
        %1183 = vmatpush.msra.mxu0 0.0
        %1184 = vmatpush.msra.mxu0 0.0
        %1185 = vmatpush.msra.mxu0 0.0
        %1186 = vmatpush.msra.mxu0 0.0
        %1187 = vmatpush.msra.mxu0 0.0
        %1188 = vmatpush.msra.mxu0 %v1157
        %1189 = vmatpush.msra.mxu0 %v1154
        %1190 = vmatpush.msra.mxu0 %v1151
        %1191 = vmatpush.msra.mxu0 %v1148
        %1192 = vmatmul.f32.gmra.mxu0 %v1165
        %v1193 = vpop.f32.mrf.mxu0
        %v1194 = vadd.f32 0.0, %v1193
        %1195 = vmatmul.f32.gmra.mxu0 %v1168
        %v1196 = vpop.f32.mrf.mxu0
        %v1197 = vadd.f32 0.0, %v1196
        %1198 = vmatmul.f32.gmra.mxu0 %v1171
        %v1199 = vpop.f32.mrf.mxu0
        %v1200 = vadd.f32 0.0, %v1199
        %1201 = vmatmul.f32.gmra.mxu0 %v1174
        %v1202 = vpop.f32.mrf.mxu0
        %v1203 = vadd.f32 0.0, %v1202
        %1204 = vdwg.mxu0
        %1205 = vmatpush.msra.mxu0 0.0
        %1206 = vmatpush.msra.mxu0 0.0
        %1207 = vmatpush.msra.mxu0 0.0
        %1208 = vmatpush.msra.mxu0 0.0
        %1209 = vmatpush.msra.mxu0 0.0
        %1210 = vmatpush.msra.mxu0 0.0
        %1211 = vmatpush.msra.mxu0 0.0
        %1212 = vmatpush.msra.mxu0 0.0
        %1213 = vmatpush.msra.mxu0 0.0
        %1214 = vmatpush.msra.mxu0 0.0
        %1215 = vmatpush.msra.mxu0 0.0
        %1216 = vmatpush.msra.mxu0 0.0
        %1217 = vmatpush.msra.mxu0 %v1158
        %1218 = vmatpush.msra.mxu0 %v1155
        %1219 = vmatpush.msra.mxu0 %v1152
        %1220 = vmatpush.msra.mxu0 %v1149
        %1221 = vmatmul.f32.gmra.mxu0 %v1165
        %v1222 = vpop.f32.mrf.mxu0
        %v1223 = vadd.f32 0.0, %v1222
        %1224 = vmatmul.f32.gmra.mxu0 %v1168
        %v1225 = vpop.f32.mrf.mxu0
        %v1226 = vadd.f32 0.0, %v1225
        %1227 = vmatmul.f32.gmra.mxu0 %v1171
        %v1228 = vpop.f32.mrf.mxu0
        %v1229 = vadd.f32 0.0, %v1228
        %1230 = vmatmul.f32.gmra.mxu0 %v1174
        %v1231 = vpop.f32.mrf.mxu0
        %v1232 = vadd.f32 0.0, %v1231
        %1233 = vdwg.mxu0
        %1234 = vmatpush.msra.mxu0 0.0
        %1235 = vmatpush.msra.mxu0 0.0
        %1236 = vmatpush.msra.mxu0 0.0
        %1237 = vmatpush.msra.mxu0 0.0
        %1238 = vmatpush.msra.mxu0 0.0
        %1239 = vmatpush.msra.mxu0 0.0
        %1240 = vmatpush.msra.mxu0 0.0
        %1241 = vmatpush.msra.mxu0 0.0
        %1242 = vmatpush.msra.mxu0 0.0
        %1243 = vmatpush.msra.mxu0 0.0
        %1244 = vmatpush.msra.mxu0 0.0
        %1245 = vmatpush.msra.mxu0 0.0
        %1246 = vmatpush.msra.mxu0 %v1159
        %1247 = vmatpush.msra.mxu0 %v1156
        %1248 = vmatpush.msra.mxu0 %v1153
        %1249 = vmatpush.msra.mxu0 %v1150
        %1250 = vmatmul.f32.gmra.mxu0 %v1165
        %v1251 = vpop.f32.mrf.mxu0
        %1252 = vmatmul.f32.gmra.mxu0 %v1168
        %v1253 = vpop.f32.mrf.mxu0
        %v1254 = vadd.f32 0.0, %v1253
        %1255 = vmatmul.f32.gmra.mxu0 %v1171
        %v1256 = vpop.f32.mrf.mxu0
        %v1257 = vadd.f32 0.0, %v1256
        %1258 = vmatmul.f32.gmra.mxu0 %v1174
        %v1259 = vpop.f32.mrf.mxu0
        %v1260 = vadd.f32 0.0, %v1259
        %1261 = vdwg.mxu0
        %v1262 = vadd.f32 %v1194, 0.0
        %v1263 = vadd.f32 %v1223, 0.0
        %v1266 = vrot.slane %v1194, 1
        %v1267 = vrot.slane %v1223, 1
        %1268 = vrot.lane.b32.xlu0 %v1266, 127
        %v1269 = vpop.permute.xlu0 %1268
        %1270 = vrot.lane.b32.xlu0 %v1267, 127
        %v1271 = vpop.permute.xlu0 %1270
        %v1272 = vsel %vm457, %v1269, %v1271
        %v1275 = vadd.f32 %v1262, %v1272
        %v1276 = vadd.f32 %v1263, %v1271
        %v1277 = vrot.slane %v1194, 2
        %v1278 = vrot.slane %v1223, 2
        %1279 = vrot.lane.b32.xlu0 %v1277, 126
        %v1280 = vpop.permute.xlu0 %1279
        %1281 = vrot.lane.b32.xlu0 %v1278, 126
        %v1282 = vpop.permute.xlu0 %1281
        %v1283 = vsel %vm498, %v1280, %v1282
        %v1286 = vadd.f32 %v1275, %v1283
        %v1287 = vadd.f32 %v1276, %v1282
        %v1288 = vrot.slane %v1194, 3
        %v1289 = vrot.slane %v1223, 3
        %1290 = vrot.lane.b32.xlu0 %v1288, 125
        %v1291 = vpop.permute.xlu0 %1290
        %1292 = vrot.lane.b32.xlu0 %v1289, 125
        %v1293 = vpop.permute.xlu0 %1292
        %v1294 = vsel %vm539, %v1291, %v1293
        %v1297 = vadd.f32 %v1286, %v1294
        %v1298 = vadd.f32 %v1287, %v1293
        %v1299 = vrot.slane %v1194, 4
        %v1300 = vrot.slane %v1223, 4
        %1301 = vrot.lane.b32.xlu0 %v1299, 124
        %v1302 = vpop.permute.xlu0 %1301
        %1303 = vrot.lane.b32.xlu0 %v1300, 124
        %v1304 = vpop.permute.xlu0 %1303
        %v1305 = vsel %vm580, %v1302, %v1304
        %v1308 = vadd.f32 %v1297, %v1305
        %v1309 = vadd.f32 %v1298, %v1304
        %v1310 = vrot.slane %v1194, 5
        %v1311 = vrot.slane %v1223, 5
        %1312 = vrot.lane.b32.xlu0 %v1310, 100
        %v1313 = vpop.permute.xlu0 %1312
        %1314 = vrot.lane.b32.xlu0 %v1311, 100
        %v1315 = vpop.permute.xlu0 %1314
        %v1316 = vsel %vm343, %v1313, %v1315
        %v1319 = vadd.f32 %v1308, %v1316
        %v1320 = vadd.f32 %v1309, %v1315
        %v1321 = vrot.slane %v1194, 6
        %v1322 = vrot.slane %v1223, 6
        %1323 = vrot.lane.b32.xlu0 %v1321, 99
        %v1324 = vpop.permute.xlu0 %1323
        %1325 = vrot.lane.b32.xlu0 %v1322, 99
        %v1326 = vpop.permute.xlu0 %1325
        %vm1327 = vcmask 809984
        %v1328 = vsel %vm1327, %v1324, %v1326
        %v1331 = vadd.f32 %v1319, %v1328
        %v1332 = vadd.f32 %v1320, %v1326
        %v1333 = vrot.slane %v1194, 7
        %v1334 = vrot.slane %v1223, 7
        %1335 = vrot.lane.b32.xlu0 %v1333, 98
        %v1336 = vpop.permute.xlu0 %1335
        %1337 = vrot.lane.b32.xlu0 %v1334, 98
        %v1338 = vpop.permute.xlu0 %1337
        %vm1339 = vcmask 801792
        %v1340 = vsel %vm1339, %v1336, %v1338
        %v1343 = vadd.f32 %v1331, %v1340
        %v1344 = vadd.f32 %v1332, %v1338
        %1347 = vrot.lane.b32.xlu0 %v1197, 97
        %v1348 = vpop.permute.xlu0 %1347
        %1349 = vrot.lane.b32.xlu0 %v1226, 97
        %v1350 = vpop.permute.xlu0 %1349
        %vm1351 = vcmask 793600
        %v1352 = vsel %vm1351, %v1348, %v1350
        %v1355 = vadd.f32 %v1343, %v1352
        %v1356 = vadd.f32 %v1344, %v1350
        %v1357 = vrot.slane %v1197, 1
        %v1358 = vrot.slane %v1226, 1
        %1359 = vrot.lane.b32.xlu0 %v1357, 96
        %v1360 = vpop.permute.xlu0 %1359
        %1361 = vrot.lane.b32.xlu0 %v1358, 96
        %v1362 = vpop.permute.xlu0 %1361
        %vm1363 = vcmask 785408
        %v1364 = vsel %vm1363, %v1360, %v1362
        %v1367 = vadd.f32 %v1355, %v1364
        %v1368 = vadd.f32 %v1356, %v1362
        %v1370 = vrot.slane %v1197, 2
        %v1371 = vrot.slane %v1226, 2
        %v1372 = vrot.slane %v1254, 2
        %1373 = vrot.lane.b32.xlu0 %v1370, 72
        %v1374 = vpop.permute.xlu0 %1373
        %1375 = vrot.lane.b32.xlu0 %v1371, 72
        %v1376 = vpop.permute.xlu0 %1375
        %1377 = vrot.lane.b32.xlu0 %v1372, 72
        %v1378 = vpop.permute.xlu0 %1377
        %v1379 = vsel %vm352, %v1374, %v1376
        %v1380 = vsel %vm352, %v1376, %v1378
        %v1383 = vadd.f32 %v1367, %v1379
        %v1384 = vadd.f32 %v1368, %v1380
        %v1385 = vrot.slane %v1197, 3
        %v1386 = vrot.slane %v1226, 3
        %v1387 = vrot.slane %v1254, 3
        %1388 = vrot.lane.b32.xlu0 %v1385, 71
        %v1389 = vpop.permute.xlu0 %1388
        %1390 = vrot.lane.b32.xlu0 %v1386, 71
        %v1391 = vpop.permute.xlu0 %1390
        %1392 = vrot.lane.b32.xlu0 %v1387, 71
        %v1393 = vpop.permute.xlu0 %1392
        %vm1394 = vcmask 580608
        %v1395 = vsel %vm1394, %v1389, %v1391
        %v1396 = vsel %vm1394, %v1391, %v1393
        %v1399 = vadd.f32 %v1383, %v1395
        %v1400 = vadd.f32 %v1384, %v1396
        %v1401 = vrot.slane %v1197, 4
        %v1402 = vrot.slane %v1226, 4
        %v1403 = vrot.slane %v1254, 4
        %1404 = vrot.lane.b32.xlu0 %v1401, 70
        %v1405 = vpop.permute.xlu0 %1404
        %1406 = vrot.lane.b32.xlu0 %v1402, 70
        %v1407 = vpop.permute.xlu0 %1406
        %1408 = vrot.lane.b32.xlu0 %v1403, 70
        %v1409 = vpop.permute.xlu0 %1408
        %vm1410 = vcmask 572416
        %v1411 = vsel %vm1410, %v1405, %v1407
        %v1412 = vsel %vm1410, %v1407, %v1409
        %v1415 = vadd.f32 %v1399, %v1411
        %v1416 = vadd.f32 %v1400, %v1412
        %v1417 = vrot.slane %v1197, 5
        %v1418 = vrot.slane %v1226, 5
        %v1419 = vrot.slane %v1254, 5
        %1420 = vrot.lane.b32.xlu0 %v1417, 69
        %v1421 = vpop.permute.xlu0 %1420
        %1422 = vrot.lane.b32.xlu0 %v1418, 69
        %v1423 = vpop.permute.xlu0 %1422
        %1424 = vrot.lane.b32.xlu0 %v1419, 69
        %v1425 = vpop.permute.xlu0 %1424
        %vm1426 = vcmask 564224
        %v1427 = vsel %vm1426, %v1421, %v1423
        %v1428 = vsel %vm1426, %v1423, %v1425
        %v1431 = vadd.f32 %v1415, %v1427
        %v1432 = vadd.f32 %v1416, %v1428
        %v1433 = vrot.slane %v1197, 6
        %v1434 = vrot.slane %v1226, 6
        %v1435 = vrot.slane %v1254, 6
        %1436 = vrot.lane.b32.xlu0 %v1433, 68
        %v1437 = vpop.permute.xlu0 %1436
        %1438 = vrot.lane.b32.xlu0 %v1434, 68
        %v1439 = vpop.permute.xlu0 %1438
        %1440 = vrot.lane.b32.xlu0 %v1435, 68
        %v1441 = vpop.permute.xlu0 %1440
        %vm1442 = vcmask 556032
        %v1443 = vsel %vm1442, %v1437, %v1439
        %v1444 = vsel %vm1442, %v1439, %v1441
        %v1447 = vadd.f32 %v1431, %v1443
        %v1448 = vadd.f32 %v1432, %v1444
        %v1449 = vrot.slane %v1197, 7
        %v1450 = vrot.slane %v1226, 7
        %v1451 = vrot.slane %v1254, 7
        %1452 = vrot.lane.b32.xlu0 %v1449, 44
        %v1453 = vpop.permute.xlu0 %1452
        %1454 = vrot.lane.b32.xlu0 %v1450, 44
        %v1455 = vpop.permute.xlu0 %1454
        %1456 = vrot.lane.b32.xlu0 %v1451, 44
        %v1457 = vpop.permute.xlu0 %1456
        %v1458 = vsel %vm361, %v1453, %v1455
        %v1459 = vsel %vm361, %v1455, %v1457
        %v1462 = vadd.f32 %v1447, %v1458
        %v1463 = vadd.f32 %v1448, %v1459
        %1467 = vrot.lane.b32.xlu0 %v1200, 43
        %v1468 = vpop.permute.xlu0 %1467
        %1469 = vrot.lane.b32.xlu0 %v1229, 43
        %v1470 = vpop.permute.xlu0 %1469
        %1471 = vrot.lane.b32.xlu0 %v1257, 43
        %v1472 = vpop.permute.xlu0 %1471
        %vm1473 = vcmask 351232
        %v1474 = vsel %vm1473, %v1468, %v1470
        %v1475 = vsel %vm1473, %v1470, %v1472
        %v1478 = vadd.f32 %v1462, %v1474
        %v1479 = vadd.f32 %v1463, %v1475
        %v1480 = vrot.slane %v1200, 1
        %v1481 = vrot.slane %v1229, 1
        %v1482 = vrot.slane %v1257, 1
        %1483 = vrot.lane.b32.xlu0 %v1480, 42
        %v1484 = vpop.permute.xlu0 %1483
        %1485 = vrot.lane.b32.xlu0 %v1481, 42
        %v1486 = vpop.permute.xlu0 %1485
        %1487 = vrot.lane.b32.xlu0 %v1482, 42
        %v1488 = vpop.permute.xlu0 %1487
        %vm1489 = vcmask 343040
        %v1490 = vsel %vm1489, %v1484, %v1486
        %v1491 = vsel %vm1489, %v1486, %v1488
        %v1494 = vadd.f32 %v1478, %v1490
        %v1495 = vadd.f32 %v1479, %v1491
        %v1496 = vrot.slane %v1200, 2
        %v1497 = vrot.slane %v1229, 2
        %v1498 = vrot.slane %v1257, 2
        %1499 = vrot.lane.b32.xlu0 %v1496, 41
        %v1500 = vpop.permute.xlu0 %1499
        %1501 = vrot.lane.b32.xlu0 %v1497, 41
        %v1502 = vpop.permute.xlu0 %1501
        %1503 = vrot.lane.b32.xlu0 %v1498, 41
        %v1504 = vpop.permute.xlu0 %1503
        %vm1505 = vcmask 334848
        %v1506 = vsel %vm1505, %v1500, %v1502
        %v1507 = vsel %vm1505, %v1502, %v1504
        %v1510 = vadd.f32 %v1494, %v1506
        %v1511 = vadd.f32 %v1495, %v1507
        %v1512 = vrot.slane %v1200, 3
        %v1513 = vrot.slane %v1229, 3
        %v1514 = vrot.slane %v1257, 3
        %1515 = vrot.lane.b32.xlu0 %v1512, 40
        %v1516 = vpop.permute.xlu0 %1515
        %1517 = vrot.lane.b32.xlu0 %v1513, 40
        %v1518 = vpop.permute.xlu0 %1517
        %1519 = vrot.lane.b32.xlu0 %v1514, 40
        %v1520 = vpop.permute.xlu0 %1519
        %vm1521 = vcmask 326656
        %v1522 = vsel %vm1521, %v1516, %v1518
        %v1523 = vsel %vm1521, %v1518, %v1520
        %v1526 = vadd.f32 %v1510, %v1522
        %v1527 = vadd.f32 %v1511, %v1523
        %v1528 = vrot.slane %v1200, 4
        %v1529 = vrot.slane %v1229, 4
        %v1530 = vrot.slane %v1257, 4
        %1531 = vrot.lane.b32.xlu0 %v1528, 16
        %v1532 = vpop.permute.xlu0 %1531
        %1533 = vrot.lane.b32.xlu0 %v1529, 16
        %v1534 = vpop.permute.xlu0 %1533
        %1535 = vrot.lane.b32.xlu0 %v1530, 16
        %v1536 = vpop.permute.xlu0 %1535
        %v1537 = vsel %vm370, %v1532, %v1534
        %v1538 = vsel %vm370, %v1534, %v1536
        %v1541 = vadd.f32 %v1526, %v1537
        %v1542 = vadd.f32 %v1527, %v1538
        %v1543 = vrot.slane %v1200, 5
        %v1544 = vrot.slane %v1229, 5
        %v1545 = vrot.slane %v1257, 5
        %1546 = vrot.lane.b32.xlu0 %v1543, 15
        %v1547 = vpop.permute.xlu0 %1546
        %1548 = vrot.lane.b32.xlu0 %v1544, 15
        %v1549 = vpop.permute.xlu0 %1548
        %1550 = vrot.lane.b32.xlu0 %v1545, 15
        %v1551 = vpop.permute.xlu0 %1550
        %vm1552 = vcmask 121856
        %v1553 = vsel %vm1552, %v1547, %v1549
        %v1554 = vsel %vm1552, %v1549, %v1551
        %v1557 = vadd.f32 %v1541, %v1553
        %v1558 = vadd.f32 %v1542, %v1554
        %v1559 = vrot.slane %v1200, 6
        %v1560 = vrot.slane %v1229, 6
        %v1561 = vrot.slane %v1257, 6
        %1562 = vrot.lane.b32.xlu0 %v1559, 14
        %v1563 = vpop.permute.xlu0 %1562
        %1564 = vrot.lane.b32.xlu0 %v1560, 14
        %v1565 = vpop.permute.xlu0 %1564
        %1566 = vrot.lane.b32.xlu0 %v1561, 14
        %v1567 = vpop.permute.xlu0 %1566
        %vm1568 = vcmask 113664
        %v1569 = vsel %vm1568, %v1563, %v1565
        %v1570 = vsel %vm1568, %v1565, %v1567
        %v1573 = vadd.f32 %v1557, %v1569
        %v1574 = vadd.f32 %v1558, %v1570
        %v1575 = vrot.slane %v1200, 7
        %v1576 = vrot.slane %v1229, 7
        %v1577 = vrot.slane %v1257, 7
        %1578 = vrot.lane.b32.xlu0 %v1575, 13
        %v1579 = vpop.permute.xlu0 %1578
        %1580 = vrot.lane.b32.xlu0 %v1576, 13
        %v1581 = vpop.permute.xlu0 %1580
        %1582 = vrot.lane.b32.xlu0 %v1577, 13
        %v1583 = vpop.permute.xlu0 %1582
        %vm1584 = vcmask 105472
        %v1585 = vsel %vm1584, %v1579, %v1581
        %v1586 = vsel %vm1584, %v1581, %v1583
        %v1589 = vadd.f32 %v1573, %v1585
        %v1590 = vadd.f32 %v1574, %v1586
        %1594 = vrot.lane.b32.xlu0 %v1203, 12
        %v1595 = vpop.permute.xlu0 %1594
        %1596 = vrot.lane.b32.xlu0 %v1232, 12
        %v1597 = vpop.permute.xlu0 %1596
        %1598 = vrot.lane.b32.xlu0 %v1260, 12
        %v1599 = vpop.permute.xlu0 %1598
        %vm1600 = vcmask 97280
        %v1601 = vsel %vm1600, %v1595, %v1597
        %v1602 = vsel %vm1600, %v1597, %v1599
        %v1605 = vadd.f32 %v1589, %v1601
        %v1606 = vadd.f32 %v1590, %v1602
        %s1607 = sld [smem:[#allocation4]]
        %v1608 = vstv %s1607
        %v1609 = vadd.f32 %v1605, %v1608
        %v1610 = vadd.f32 %v1606, %v1608
        %v1613 = vrot.slane %v1610, 7
        %v1614 = vsel %vm435, %v1609, %v1613
        %vm1616 = vcmp.lt.s32.totalorder %v333, 224
        %vm1617 = vmand %vm334, %vm1616
        %1618 = vst.msk [vmem:[%s331] sm:$0x3] %vm1617, %v1614
        %s1619 = sand.u32 %s202, 1
        %s1620 = scalar_lea.sflag [#allocation7], %s1619
        %s1621 = sand.u32 %s202, 1
        %s1622 = smul.addr %s1621, 2
        %s1623 = scalar_lea.vmem [#allocation10], %s1622
        // Predicated region
        $region57: #{tpu_custom_call.1} parent=47 // pred_check
          %p1624 = pneg %p212
        $region58: #{tpu_custom_call.1} parent=47 // pred_check_branch
          %1626 = sbr.rel (%p1624) target = $region60
        $region59: #{tpu_custom_call.1} parent=47 // pred_region
          %1628 = vsyncadd %s1620, 0
          %s1629 = smul.addr %s31, 2
          %s1630 = smul.addr %s30, 4
          %s1631 = sadd.s32 %s1629, %s1630
          %s1632 = scalar_lea.hbm %s7, %s1631
          %s1634 = sshll.u32 %s1623, 4
          %s1635 = int_to_ptr.vmem [resolvable:$true] %s1634
          %s1636 = sshll.u32 %s1632, 4
          %s1637 = int_to_ptr.hbm [resolvable:$true] %s1636
          %1639 = dma.vmem_to_hbm [thread:$0]  %s1635, 32, %s1637, %s1620
        $region60: #{tpu_custom_call.1} parent=47 // pred_fallthru
          _
      $region48: #{tpu_custom_call.1} parent=5 // pred_fallthru
        _
      %p1640 = scmp.le.s32.totalorder 2, %s21
      // Predicated region
      $region61: #{tpu_custom_call.1} parent=5 // pred_check
        %p1641 = pneg %p1640
      $region62: #{tpu_custom_call.1} parent=5 // pred_check_branch
        %1643 = sbr.rel (%p1641) target = $region64
      $region63: #{tpu_custom_call.1} parent=5 // pred_region
        %s1644 = ssub.s32 %s21, 2
        // Predicated region
        $region65: #{tpu_custom_call.1} parent=63 // pred_check
          %p1645 = pneg %p218
        $region66: #{tpu_custom_call.1} parent=63 // pred_check_branch
          %1647 = sbr.rel (%p1645) target = $region68
        $region67: #{tpu_custom_call.1} parent=63 // pred_region
          %s1648 = sand.u32 %s203, 1
          %s1649 = scalar_lea.sflag [#allocation7], %s1648
          %s1650 = sand.u32 %s203, 1
          %s1651 = smul.addr %s1650, 2
          %s1652 = scalar_lea.vmem [#allocation10], %s1651
          %1654 = dma.done %s1649, 32
        $region68: #{tpu_custom_call.1} parent=63 // pred_fallthru
          _
      $region64: #{tpu_custom_call.1} parent=5 // pred_fallthru
        _
    $region6: #{tpu_custom_call.1} parent=1 // loop_footer
      %s25 = sadd.s32 1, %s21
    $region7: #{tpu_custom_call.1} parent=1 // loop_footer_branch
      %20 = sbr.rel target = $region3
    $region8: #{tpu_custom_call.1} parent=1 // loop_exit
      _
    %1655 = vsyncpa [#allocation6], 1
    %s1656 = scalar_lea.sflag [#allocation6], 1
    %1657 = vsyncpa %s1656, 1
    %1658 = vsyncpa [#allocation9], 1
    %1659 = vsyncpa [#allocation7], 1
    %s1660 = scalar_lea.sflag [#allocation7], 1
    %1661 = vsyncpa %s1660, 1

</llo_original>
